<compile_context>
chip_gen: v6e
topology: v6e:2x2x1
jax: 0.10.0
libtpu: 0.0.40
codegen_flags: <defaults>
</compile_context>

<pallas_src>
import functools
import math

import jax
import jax.numpy as jnp
from jax.experimental import pallas as pl
from jax.experimental.pallas import tpu as pltpu


# ----------------------------------------------------------------------------
# Fused encoder-layer kernel (one batch element per grid step)
# ----------------------------------------------------------------------------
def _encoder_layer_kernel(x_ref, g1_ref, bb1_ref, wqkv_ref, bqkv_ref, wo_ref, bo_ref,
                          g2_ref, bb2_ref, w1_ref, b1_ref, w2_ref, b2_ref,
                          o_ref, *, nhead, eps):
    x = x_ref[0].astype(jnp.float32)                          # (S, D) f32

    S, D = x.shape
    Dh = D // nhead

    # ---------------- LayerNorm 1 (f32) ----------------
    mu = jnp.mean(x, axis=-1, keepdims=True)
    var = jnp.mean(jnp.square(x - mu), axis=-1, keepdims=True)
    xn = (x - mu) * jax.lax.rsqrt(var + eps) * g1_ref[...] + bb1_ref[...]

    # ---------------- fused QKV projection (bf16 MXU, f32 acc) ----------------
    # softmax scale 1/sqrt(Dh) is pre-folded into the Q columns of wqkv / bqkv.
    qkv = jnp.dot(xn.astype(jnp.bfloat16), wqkv_ref[...],
                  preferred_element_type=jnp.float32) + bqkv_ref[...]   # (S, 3D)
    qkv16 = qkv.astype(jnp.bfloat16)                                     # cast once

    wo = wo_ref[...]                                                     # (D, D) bf16

    # ---------------- per-head attention + per-head out-proj accumulation -----
    # NOTE: heads kept as an unrolled loop of small 2-D matmuls (S=8, Dh=32);
    # out-projection accumulated per head so no (S, D) concat / relayout needed.
    proj = jnp.zeros((S, D), jnp.float32)
    for h in range(nhead):
        qh = qkv16[:, h * Dh:(h + 1) * Dh]                               # (S, Dh)
        kh = qkv16[:, D + h * Dh:D + (h + 1) * Dh]                       # (S, Dh)
        vh = qkv16[:, 2 * D + h * Dh:2 * D + (h + 1) * Dh]               # (S, Dh)

        # scores = q @ k^T  (contract over Dh, no materialized transpose)
        s = jax.lax.dot_general(qh, kh, (((1,), (1,)), ((), ())),
                                preferred_element_type=jnp.float32)      # (S, S)
        s = s - jnp.max(s, axis=-1, keepdims=True)
        p = jnp.exp(s)
        inv_l = pl.reciprocal(jnp.sum(p, axis=-1, keepdims=True), approx=True)
        oh = jnp.dot(p.astype(jnp.bfloat16), vh,
                     preferred_element_type=jnp.float32) * inv_l         # (S, Dh)

        proj = proj + jnp.dot(oh.astype(jnp.bfloat16),
                              wo[h * Dh:(h + 1) * Dh, :],
                              preferred_element_type=jnp.float32)        # (S, D)

    y = x + proj + bo_ref[...]                                           # residual 1

    # ---------------- LayerNorm 2 + FFN + residual (f32 LN, bf16 MXU) ---------
    mu2 = jnp.mean(y, axis=-1, keepdims=True)
    var2 = jnp.mean(jnp.square(y - mu2), axis=-1, keepdims=True)
    yn = (y - mu2) * jax.lax.rsqrt(var2 + eps) * g2_ref[...] + bb2_ref[...]

    hdn = jnp.dot(yn.astype(jnp.bfloat16), w1_ref[...],
                  preferred_element_type=jnp.float32) + b1_ref[...]
    hdn = jnp.maximum(hdn, 0.0)                                          # ReLU (f32)
    ff = jnp.dot(hdn.astype(jnp.bfloat16), w2_ref[...],
                 preferred_element_type=jnp.float32) + b2_ref[...]

    o_ref[0] = (y + ff).astype(o_ref.dtype)                              # residual 2


# ----------------------------------------------------------------------------
# Wrapper
# ----------------------------------------------------------------------------
_VMEM_LIMIT = 32 * 1024 * 1024  # safe across v5e / v6e / v7x scoped defaults


def transformer_encoder_layer(x, p, *, nhead, eps=1e-5):
    """x: (B, S, D) float -> pre-norm encoder layer output, bf16 residual stream."""
    B, S, D = x.shape
    assert D % nhead == 0
    F = p["w1"].shape[1]

    # Residual stream kept in bf16 in HBM (halves activation DMA); math is f32
    # inside the kernel.
    x16 = x.astype(jnp.bfloat16)

    flops = B * (8 * S * D * D + 4 * S * S * D + 4 * S * D * F)
    transcendentals = B * (nhead * S * S + nhead * S + 2 * S)
    bytes_accessed = (2 * B * S * D) * 2 + (4 * D * D + 2 * D * F) * 2 \
        + (3 * D + D + F + 5 * D) * 4

    const = lambda b: (0, 0)
    out = pl.pallas_call(
        functools.partial(_encoder_layer_kernel, nhead=nhead, eps=eps),
        out_shape=jax.ShapeDtypeStruct((B, S, D), jnp.bfloat16),
        grid=(B,),
        in_specs=[
            pl.BlockSpec((1, S, D), lambda b: (b, 0, 0)),   # x tile (per batch)
            pl.BlockSpec((1, D), const),                    # ln1 gamma   (resident)
            pl.BlockSpec((1, D), const),                    # ln1 beta
            pl.BlockSpec((D, 3 * D), const),                # fused QKV weight
            pl.BlockSpec((1, 3 * D), const),                # fused QKV bias
            pl.BlockSpec((D, D), const),                    # out-proj weight
            pl.BlockSpec((1, D), const),                    # out-proj bias
            pl.BlockSpec((1, D), const),                    # ln2 gamma
            pl.BlockSpec((1, D), const),                    # ln2 beta
            pl.BlockSpec((D, F), const),                    # ffn w1
            pl.BlockSpec((1, F), const),                    # ffn b1
            pl.BlockSpec((F, D), const),                    # ffn w2
            pl.BlockSpec((1, D), const),                    # ffn b2
        ],
        out_specs=pl.BlockSpec((1, S, D), lambda b: (b, 0, 0)),
        input_output_aliases={0: 0},                        # donate residual buffer
        compiler_params=pltpu.CompilerParams(
            dimension_semantics=("parallel",),
            vmem_limit_bytes=_VMEM_LIMIT),
        cost_estimate=pl.CostEstimate(flops=flops,
                                      transcendentals=transcendentals,
                                      bytes_accessed=bytes_accessed),
    )(x16, p["ln1_g"], p["ln1_b"], p["wqkv"], p["bqkv"], p["wo"], p["bo"],
      p["ln2_g"], p["ln2_b"], p["w1"], p["b1"], p["w2"], p["b2"])
    return out


# ----------------------------------------------------------------------------
# Deterministic parameter construction (weights bf16 for the MXU; the softmax
# scale 1/sqrt(Dh) is folded into the Q columns of wqkv / bqkv).
# ----------------------------------------------------------------------------
def init_params(key, d_model, dim_ff, nhead):
    def lin(k, fi, fo):
        kw, kb = jax.random.split(k)
        w = jax.random.normal(kw, (fi, fo), jnp.float32) / math.sqrt(fi)
        b = jax.random.normal(kb, (1, fo), jnp.float32) * 0.01
        return w, b

    ks = jax.random.split(key, 4)
    wqkv, bqkv = lin(ks[0], d_model, 3 * d_model)   # fused in-projection
    wo, bo = lin(ks[1], d_model, d_model)
    w1, b1 = lin(ks[2], d_model, dim_ff)
    w2, b2 = lin(ks[3], dim_ff, d_model)

    # Fold the attention scale into Q (weight AND bias, as PyTorch scales q
    # after the in-projection including its bias).
    scale = 1.0 / math.sqrt(d_model // nhead)
    wqkv = wqkv.at[:, :d_model].multiply(scale)
    bqkv = bqkv.at[:, :d_model].multiply(scale)

    ones = jnp.ones((1, d_model), jnp.float32)
    zeros = jnp.zeros((1, d_model), jnp.float32)
    return dict(wqkv=wqkv.astype(jnp.bfloat16), bqkv=bqkv,
                wo=wo.astype(jnp.bfloat16), bo=bo,
                w1=w1.astype(jnp.bfloat16), b1=b1,
                w2=w2.astype(jnp.bfloat16), b2=b2,
                ln1_g=ones, ln1_b=zeros, ln2_g=ones, ln2_b=zeros)


# ----------------------------------------------------------------------------
# Main
# ----------------------------------------------------------------------------
if __name__ == "__main__":
    # Small, lane-dense shapes consistent with the module (d_model multiple of 128).
    B, S, D = 2, 8, 128
    NHEAD, DIM_FF = 4, 256

    root = jax.random.PRNGKey(0)
    k_x, k_p = jax.random.split(root)

    x = jax.random.normal(k_x, (B, S, D), jnp.float32)
    params = init_params(k_p, D, DIM_FF, NHEAD)

    fwd = jax.jit(functools.partial(transformer_encoder_layer, nhead=NHEAD))
    out = jax.block_until_ready(fwd(x, params))

    assert out.shape == (B, S, D), out.shape
    assert bool(jnp.all(jnp.isfinite(out.astype(jnp.float32))))
    print("KERNEL_OK")
</pallas_src>

<mosaic_0001>
module attributes {stable_mosaic.version = 11 : i64} {
  func.func @_encoder_layer_kernel(%arg0: i32, %arg1: memref<1x8x128xbf16, #tpu.memory_space<vmem>>, %arg2: memref<1x128xf32, #tpu.memory_space<vmem>>, %arg3: memref<1x128xf32, #tpu.memory_space<vmem>>, %arg4: memref<128x384xbf16, #tpu.memory_space<vmem>>, %arg5: memref<1x384xf32, #tpu.memory_space<vmem>>, %arg6: memref<128x128xbf16, #tpu.memory_space<vmem>>, %arg7: memref<1x128xf32, #tpu.memory_space<vmem>>, %arg8: memref<1x128xf32, #tpu.memory_space<vmem>>, %arg9: memref<1x128xf32, #tpu.memory_space<vmem>>, %arg10: memref<128x256xbf16, #tpu.memory_space<vmem>>, %arg11: memref<1x256xf32, #tpu.memory_space<vmem>>, %arg12: memref<256x128xbf16, #tpu.memory_space<vmem>>, %arg13: memref<1x128xf32, #tpu.memory_space<vmem>>, %arg14: memref<1x8x128xbf16, #tpu.memory_space<vmem>>) attributes {dimension_semantics = [#tpu.dimension_semantics<parallel>], iteration_bounds = array<i64: 2>, scalar_prefetch = 0 : i64, scratch_operands = 0 : i64, tpu.core_type = #tpu.core_type<tc>, window_params = [{transform_indices = @transform_0, window_bounds = array<i64: 1, 8, 128>}, {pipeline_mode = #tpu.pipeline_mode<synchronous>, transform_indices = @transform_1, window_bounds = array<i64: 1, 128>}, {pipeline_mode = #tpu.pipeline_mode<synchronous>, transform_indices = @transform_2, window_bounds = array<i64: 1, 128>}, {pipeline_mode = #tpu.pipeline_mode<synchronous>, transform_indices = @transform_3, window_bounds = array<i64: 128, 384>}, {pipeline_mode = #tpu.pipeline_mode<synchronous>, transform_indices = @transform_4, window_bounds = array<i64: 1, 384>}, {pipeline_mode = #tpu.pipeline_mode<synchronous>, transform_indices = @transform_5, window_bounds = array<i64: 128, 128>}, {pipeline_mode = #tpu.pipeline_mode<synchronous>, transform_indices = @transform_6, window_bounds = array<i64: 1, 128>}, {pipeline_mode = #tpu.pipeline_mode<synchronous>, transform_indices = @transform_7, window_bounds = array<i64: 1, 128>}, {pipeline_mode = #tpu.pipeline_mode<synchronous>, transform_indices = @transform_8, window_bounds = array<i64: 1, 128>}, {pipeline_mode = #tpu.pipeline_mode<synchronous>, transform_indices = @transform_9, window_bounds = array<i64: 128, 256>}, {pipeline_mode = #tpu.pipeline_mode<synchronous>, transform_indices = @transform_10, window_bounds = array<i64: 1, 256>}, {pipeline_mode = #tpu.pipeline_mode<synchronous>, transform_indices = @transform_11, window_bounds = array<i64: 256, 128>}, {pipeline_mode = #tpu.pipeline_mode<synchronous>, transform_indices = @transform_12, window_bounds = array<i64: 1, 128>}, {transform_indices = @transform_13, window_bounds = array<i64: 1, 8, 128>}]} {
    %c0 = arith.constant 0 : index
    %c0_0 = arith.constant 0 : index
    %c0_1 = arith.constant 0 : index
    %0 = vector.load %arg1[%c0, %c0_0, %c0_1] : memref<1x8x128xbf16, #tpu.memory_space<vmem>>, vector<1x8x128xbf16>
    %1 = vector.shape_cast %0 : vector<1x8x128xbf16> to vector<8x128xbf16>
    %2 = arith.extf %1 : vector<8x128xbf16> to vector<8x128xf32>
    %cst = arith.constant dense<0.000000e+00> : vector<8xf32>
    %3 = vector.multi_reduction <add>, %2, %cst [1] : vector<8x128xf32> to vector<8xf32>
    %4 = vector.shape_cast %3 : vector<8xf32> to vector<8x1xf32>
    %cst_2 = arith.constant 1.280000e+02 : f32
    %5 = vector.broadcast %cst_2 : f32 to vector<8x1xf32>
    %6 = arith.divf %4, %5 : vector<8x1xf32>
    %7 = vector.broadcast %6 : vector<8x1xf32> to vector<8x128xf32>
    %8 = arith.subf %2, %7 : vector<8x128xf32>
    %9 = arith.mulf %8, %8 : vector<8x128xf32>
    %cst_3 = arith.constant dense<0.000000e+00> : vector<8xf32>
    %10 = vector.multi_reduction <add>, %9, %cst_3 [1] : vector<8x128xf32> to vector<8xf32>
    %11 = vector.shape_cast %10 : vector<8xf32> to vector<8x1xf32>
    %cst_4 = arith.constant 1.280000e+02 : f32
    %12 = vector.broadcast %cst_4 : f32 to vector<8x1xf32>
    %13 = arith.divf %11, %12 : vector<8x1xf32>
    %14 = vector.broadcast %6 : vector<8x1xf32> to vector<8x128xf32>
    %15 = arith.subf %2, %14 : vector<8x128xf32>
    %cst_5 = arith.constant 9.99999974E-6 : f32
    %16 = vector.broadcast %cst_5 : f32 to vector<8x1xf32>
    %17 = arith.addf %13, %16 : vector<8x1xf32>
    %18 = math.rsqrt %17 : vector<8x1xf32>
    %19 = vector.broadcast %18 : vector<8x1xf32> to vector<8x128xf32>
    %20 = arith.mulf %15, %19 : vector<8x128xf32>
    %c0_6 = arith.constant 0 : index
    %c0_7 = arith.constant 0 : index
    %21 = vector.load %arg2[%c0_6, %c0_7] : memref<1x128xf32, #tpu.memory_space<vmem>>, vector<1x128xf32>
    %22 = vector.broadcast %21 : vector<1x128xf32> to vector<8x128xf32>
    %23 = arith.mulf %20, %22 : vector<8x128xf32>
    %c0_8 = arith.constant 0 : index
    %c0_9 = arith.constant 0 : index
    %24 = vector.load %arg3[%c0_8, %c0_9] : memref<1x128xf32, #tpu.memory_space<vmem>>, vector<1x128xf32>
    %25 = vector.broadcast %24 : vector<1x128xf32> to vector<8x128xf32>
    %26 = arith.addf %23, %25 : vector<8x128xf32>
    %27 = arith.truncf %26 : vector<8x128xf32> to vector<8x128xbf16>
    %c0_10 = arith.constant 0 : index
    %c0_11 = arith.constant 0 : index
    %28 = vector.load %arg4[%c0_10, %c0_11] : memref<128x384xbf16, #tpu.memory_space<vmem>>, vector<128x384xbf16>
    %cst_12 = arith.constant dense<0.000000e+00> : vector<8x384xf32>
    %29 = tpu.matmul %27, %28, %cst_12 {dimension_numbers = #tpu.dot_dimension_numbers<[1], [0], [0], [1], [0, 0, 1, 1], [], []>} : vector<8x128xbf16>, vector<128x384xbf16>, vector<8x384xf32> -> vector<8x384xf32>
    %c0_13 = arith.constant 0 : index
    %c0_14 = arith.constant 0 : index
    %30 = vector.load %arg5[%c0_13, %c0_14] : memref<1x384xf32, #tpu.memory_space<vmem>>, vector<1x384xf32>
    %31 = vector.broadcast %30 : vector<1x384xf32> to vector<8x384xf32>
    %32 = arith.addf %29, %31 : vector<8x384xf32>
    %33 = arith.truncf %32 : vector<8x384xf32> to vector<8x384xbf16>
    %c0_15 = arith.constant 0 : index
    %c0_16 = arith.constant 0 : index
    %34 = vector.load %arg6[%c0_15, %c0_16] : memref<128x128xbf16, #tpu.memory_space<vmem>>, vector<128x128xbf16>
    %cst_17 = arith.constant 0.000000e+00 : f32
    %35 = vector.broadcast %cst_17 : f32 to vector<8x128xf32>
    %36 = vector.extract_strided_slice %33 {offsets = [0, 0], sizes = [8, 32], strides = [1, 1]} : vector<8x384xbf16> to vector<8x32xbf16>
    %37 = vector.extract_strided_slice %33 {offsets = [0, 128], sizes = [8, 32], strides = [1, 1]} : vector<8x384xbf16> to vector<8x32xbf16>
    %38 = vector.extract_strided_slice %33 {offsets = [0, 256], sizes = [8, 32], strides = [1, 1]} : vector<8x384xbf16> to vector<8x32xbf16>
    %cst_18 = arith.constant dense<0.000000e+00> : vector<8x8xf32>
    %39 = tpu.matmul %36, %37, %cst_18 {dimension_numbers = #tpu.dot_dimension_numbers<[1], [1], [0], [0], [0, 0, 1, 0], [], []>} : vector<8x32xbf16>, vector<8x32xbf16>, vector<8x8xf32> -> vector<8x8xf32>
    %cst_19 = arith.constant dense<0xFF800000> : vector<8xf32>
    %40 = vector.multi_reduction <maximumf>, %39, %cst_19 [1] : vector<8x8xf32> to vector<8xf32>
    %41 = vector.shape_cast %40 : vector<8xf32> to vector<8x1xf32>
    %42 = vector.broadcast %41 : vector<8x1xf32> to vector<8x8xf32>
    %43 = arith.subf %39, %42 : vector<8x8xf32>
    %44 = math.exp %43 : vector<8x8xf32>
    %cst_20 = arith.constant dense<0.000000e+00> : vector<8xf32>
    %45 = vector.multi_reduction <add>, %44, %cst_20 [1] : vector<8x8xf32> to vector<8xf32>
    %46 = vector.shape_cast %45 : vector<8xf32> to vector<8x1xf32>
    %47 = tpu.reciprocal %46 {approx = true} : vector<8x1xf32> -> vector<8x1xf32>
    %48 = arith.truncf %44 : vector<8x8xf32> to vector<8x8xbf16>
    %cst_21 = arith.constant dense<0.000000e+00> : vector<8x32xf32>
    %49 = tpu.matmul %48, %38, %cst_21 {dimension_numbers = #tpu.dot_dimension_numbers<[1], [0], [0], [1], [0, 0, 1, 1], [], []>} : vector<8x8xbf16>, vector<8x32xbf16>, vector<8x32xf32> -> vector<8x32xf32>
    %50 = vector.broadcast %47 : vector<8x1xf32> to vector<8x32xf32>
    %51 = arith.mulf %49, %50 : vector<8x32xf32>
    %52 = arith.truncf %51 : vector<8x32xf32> to vector<8x32xbf16>
    %53 = vector.extract_strided_slice %34 {offsets = [0, 0], sizes = [32, 128], strides = [1, 1]} : vector<128x128xbf16> to vector<32x128xbf16>
    %cst_22 = arith.constant dense<0.000000e+00> : vector<8x128xf32>
    %54 = tpu.matmul %52, %53, %cst_22 {dimension_numbers = #tpu.dot_dimension_numbers<[1], [0], [0], [1], [0, 0, 1, 1], [], []>} : vector<8x32xbf16>, vector<32x128xbf16>, vector<8x128xf32> -> vector<8x128xf32>
    %55 = arith.addf %35, %54 : vector<8x128xf32>
    %56 = vector.extract_strided_slice %33 {offsets = [0, 32], sizes = [8, 32], strides = [1, 1]} : vector<8x384xbf16> to vector<8x32xbf16>
    %57 = vector.extract_strided_slice %33 {offsets = [0, 160], sizes = [8, 32], strides = [1, 1]} : vector<8x384xbf16> to vector<8x32xbf16>
    %58 = vector.extract_strided_slice %33 {offsets = [0, 288], sizes = [8, 32], strides = [1, 1]} : vector<8x384xbf16> to vector<8x32xbf16>
    %cst_23 = arith.constant dense<0.000000e+00> : vector<8x8xf32>
    %59 = tpu.matmul %56, %57, %cst_23 {dimension_numbers = #tpu.dot_dimension_numbers<[1], [1], [0], [0], [0, 0, 1, 0], [], []>} : vector<8x32xbf16>, vector<8x32xbf16>, vector<8x8xf32> -> vector<8x8xf32>
    %cst_24 = arith.constant dense<0xFF800000> : vector<8xf32>
    %60 = vector.multi_reduction <maximumf>, %59, %cst_24 [1] : vector<8x8xf32> to vector<8xf32>
    %61 = vector.shape_cast %60 : vector<8xf32> to vector<8x1xf32>
    %62 = vector.broadcast %61 : vector<8x1xf32> to vector<8x8xf32>
    %63 = arith.subf %59, %62 : vector<8x8xf32>
    %64 = math.exp %63 : vector<8x8xf32>
    %cst_25 = arith.constant dense<0.000000e+00> : vector<8xf32>
    %65 = vector.multi_reduction <add>, %64, %cst_25 [1] : vector<8x8xf32> to vector<8xf32>
    %66 = vector.shape_cast %65 : vector<8xf32> to vector<8x1xf32>
    %67 = tpu.reciprocal %66 {approx = true} : vector<8x1xf32> -> vector<8x1xf32>
    %68 = arith.truncf %64 : vector<8x8xf32> to vector<8x8xbf16>
    %cst_26 = arith.constant dense<0.000000e+00> : vector<8x32xf32>
    %69 = tpu.matmul %68, %58, %cst_26 {dimension_numbers = #tpu.dot_dimension_numbers<[1], [0], [0], [1], [0, 0, 1, 1], [], []>} : vector<8x8xbf16>, vector<8x32xbf16>, vector<8x32xf32> -> vector<8x32xf32>
    %70 = vector.broadcast %67 : vector<8x1xf32> to vector<8x32xf32>
    %71 = arith.mulf %69, %70 : vector<8x32xf32>
    %72 = arith.truncf %71 : vector<8x32xf32> to vector<8x32xbf16>
    %73 = vector.extract_strided_slice %34 {offsets = [32, 0], sizes = [32, 128], strides = [1, 1]} : vector<128x128xbf16> to vector<32x128xbf16>
    %cst_27 = arith.constant dense<0.000000e+00> : vector<8x128xf32>
    %74 = tpu.matmul %72, %73, %cst_27 {dimension_numbers = #tpu.dot_dimension_numbers<[1], [0], [0], [1], [0, 0, 1, 1], [], []>} : vector<8x32xbf16>, vector<32x128xbf16>, vector<8x128xf32> -> vector<8x128xf32>
    %75 = arith.addf %55, %74 : vector<8x128xf32>
    %76 = vector.extract_strided_slice %33 {offsets = [0, 64], sizes = [8, 32], strides = [1, 1]} : vector<8x384xbf16> to vector<8x32xbf16>
    %77 = vector.extract_strided_slice %33 {offsets = [0, 192], sizes = [8, 32], strides = [1, 1]} : vector<8x384xbf16> to vector<8x32xbf16>
    %78 = vector.extract_strided_slice %33 {offsets = [0, 320], sizes = [8, 32], strides = [1, 1]} : vector<8x384xbf16> to vector<8x32xbf16>
    %cst_28 = arith.constant dense<0.000000e+00> : vector<8x8xf32>
    %79 = tpu.matmul %76, %77, %cst_28 {dimension_numbers = #tpu.dot_dimension_numbers<[1], [1], [0], [0], [0, 0, 1, 0], [], []>} : vector<8x32xbf16>, vector<8x32xbf16>, vector<8x8xf32> -> vector<8x8xf32>
    %cst_29 = arith.constant dense<0xFF800000> : vector<8xf32>
    %80 = vector.multi_reduction <maximumf>, %79, %cst_29 [1] : vector<8x8xf32> to vector<8xf32>
    %81 = vector.shape_cast %80 : vector<8xf32> to vector<8x1xf32>
    %82 = vector.broadcast %81 : vector<8x1xf32> to vector<8x8xf32>
    %83 = arith.subf %79, %82 : vector<8x8xf32>
    %84 = math.exp %83 : vector<8x8xf32>
    %cst_30 = arith.constant dense<0.000000e+00> : vector<8xf32>
    %85 = vector.multi_reduction <add>, %84, %cst_30 [1] : vector<8x8xf32> to vector<8xf32>
    %86 = vector.shape_cast %85 : vector<8xf32> to vector<8x1xf32>
    %87 = tpu.reciprocal %86 {approx = true} : vector<8x1xf32> -> vector<8x1xf32>
    %88 = arith.truncf %84 : vector<8x8xf32> to vector<8x8xbf16>
    %cst_31 = arith.constant dense<0.000000e+00> : vector<8x32xf32>
    %89 = tpu.matmul %88, %78, %cst_31 {dimension_numbers = #tpu.dot_dimension_numbers<[1], [0], [0], [1], [0, 0, 1, 1], [], []>} : vector<8x8xbf16>, vector<8x32xbf16>, vector<8x32xf32> -> vector<8x32xf32>
    %90 = vector.broadcast %87 : vector<8x1xf32> to vector<8x32xf32>
    %91 = arith.mulf %89, %90 : vector<8x32xf32>
    %92 = arith.truncf %91 : vector<8x32xf32> to vector<8x32xbf16>
    %93 = vector.extract_strided_slice %34 {offsets = [64, 0], sizes = [32, 128], strides = [1, 1]} : vector<128x128xbf16> to vector<32x128xbf16>
    %cst_32 = arith.constant dense<0.000000e+00> : vector<8x128xf32>
    %94 = tpu.matmul %92, %93, %cst_32 {dimension_numbers = #tpu.dot_dimension_numbers<[1], [0], [0], [1], [0, 0, 1, 1], [], []>} : vector<8x32xbf16>, vector<32x128xbf16>, vector<8x128xf32> -> vector<8x128xf32>
    %95 = arith.addf %75, %94 : vector<8x128xf32>
    %96 = vector.extract_strided_slice %33 {offsets = [0, 96], sizes = [8, 32], strides = [1, 1]} : vector<8x384xbf16> to vector<8x32xbf16>
    %97 = vector.extract_strided_slice %33 {offsets = [0, 224], sizes = [8, 32], strides = [1, 1]} : vector<8x384xbf16> to vector<8x32xbf16>
    %98 = vector.extract_strided_slice %33 {offsets = [0, 352], sizes = [8, 32], strides = [1, 1]} : vector<8x384xbf16> to vector<8x32xbf16>
    %cst_33 = arith.constant dense<0.000000e+00> : vector<8x8xf32>
    %99 = tpu.matmul %96, %97, %cst_33 {dimension_numbers = #tpu.dot_dimension_numbers<[1], [1], [0], [0], [0, 0, 1, 0], [], []>} : vector<8x32xbf16>, vector<8x32xbf16>, vector<8x8xf32> -> vector<8x8xf32>
    %cst_34 = arith.constant dense<0xFF800000> : vector<8xf32>
    %100 = vector.multi_reduction <maximumf>, %99, %cst_34 [1] : vector<8x8xf32> to vector<8xf32>
    %101 = vector.shape_cast %100 : vector<8xf32> to vector<8x1xf32>
    %102 = vector.broadcast %101 : vector<8x1xf32> to vector<8x8xf32>
    %103 = arith.subf %99, %102 : vector<8x8xf32>
    %104 = math.exp %103 : vector<8x8xf32>
    %cst_35 = arith.constant dense<0.000000e+00> : vector<8xf32>
    %105 = vector.multi_reduction <add>, %104, %cst_35 [1] : vector<8x8xf32> to vector<8xf32>
    %106 = vector.shape_cast %105 : vector<8xf32> to vector<8x1xf32>
    %107 = tpu.reciprocal %106 {approx = true} : vector<8x1xf32> -> vector<8x1xf32>
    %108 = arith.truncf %104 : vector<8x8xf32> to vector<8x8xbf16>
    %cst_36 = arith.constant dense<0.000000e+00> : vector<8x32xf32>
    %109 = tpu.matmul %108, %98, %cst_36 {dimension_numbers = #tpu.dot_dimension_numbers<[1], [0], [0], [1], [0, 0, 1, 1], [], []>} : vector<8x8xbf16>, vector<8x32xbf16>, vector<8x32xf32> -> vector<8x32xf32>
    %110 = vector.broadcast %107 : vector<8x1xf32> to vector<8x32xf32>
    %111 = arith.mulf %109, %110 : vector<8x32xf32>
    %112 = arith.truncf %111 : vector<8x32xf32> to vector<8x32xbf16>
    %113 = vector.extract_strided_slice %34 {offsets = [96, 0], sizes = [32, 128], strides = [1, 1]} : vector<128x128xbf16> to vector<32x128xbf16>
    %cst_37 = arith.constant dense<0.000000e+00> : vector<8x128xf32>
    %114 = tpu.matmul %112, %113, %cst_37 {dimension_numbers = #tpu.dot_dimension_numbers<[1], [0], [0], [1], [0, 0, 1, 1], [], []>} : vector<8x32xbf16>, vector<32x128xbf16>, vector<8x128xf32> -> vector<8x128xf32>
    %115 = arith.addf %95, %114 : vector<8x128xf32>
    %116 = arith.addf %2, %115 : vector<8x128xf32>
    %c0_38 = arith.constant 0 : index
    %c0_39 = arith.constant 0 : index
    %117 = vector.load %arg7[%c0_38, %c0_39] : memref<1x128xf32, #tpu.memory_space<vmem>>, vector<1x128xf32>
    %118 = vector.broadcast %117 : vector<1x128xf32> to vector<8x128xf32>
    %119 = arith.addf %116, %118 : vector<8x128xf32>
    %cst_40 = arith.constant dense<0.000000e+00> : vector<8xf32>
    %120 = vector.multi_reduction <add>, %119, %cst_40 [1] : vector<8x128xf32> to vector<8xf32>
    %121 = vector.shape_cast %120 : vector<8xf32> to vector<8x1xf32>
    %cst_41 = arith.constant 1.280000e+02 : f32
    %122 = vector.broadcast %cst_41 : f32 to vector<8x1xf32>
    %123 = arith.divf %121, %122 : vector<8x1xf32>
    %124 = vector.broadcast %123 : vector<8x1xf32> to vector<8x128xf32>
    %125 = arith.subf %119, %124 : vector<8x128xf32>
    %126 = arith.mulf %125, %125 : vector<8x128xf32>
    %cst_42 = arith.constant dense<0.000000e+00> : vector<8xf32>
    %127 = vector.multi_reduction <add>, %126, %cst_42 [1] : vector<8x128xf32> to vector<8xf32>
    %128 = vector.shape_cast %127 : vector<8xf32> to vector<8x1xf32>
    %cst_43 = arith.constant 1.280000e+02 : f32
    %129 = vector.broadcast %cst_43 : f32 to vector<8x1xf32>
    %130 = arith.divf %128, %129 : vector<8x1xf32>
    %131 = vector.broadcast %123 : vector<8x1xf32> to vector<8x128xf32>
    %132 = arith.subf %119, %131 : vector<8x128xf32>
    %cst_44 = arith.constant 9.99999974E-6 : f32
    %133 = vector.broadcast %cst_44 : f32 to vector<8x1xf32>
    %134 = arith.addf %130, %133 : vector<8x1xf32>
    %135 = math.rsqrt %134 : vector<8x1xf32>
    %136 = vector.broadcast %135 : vector<8x1xf32> to vector<8x128xf32>
    %137 = arith.mulf %132, %136 : vector<8x128xf32>
    %c0_45 = arith.constant 0 : index
    %c0_46 = arith.constant 0 : index
    %138 = vector.load %arg8[%c0_45, %c0_46] : memref<1x128xf32, #tpu.memory_space<vmem>>, vector<1x128xf32>
    %139 = vector.broadcast %138 : vector<1x128xf32> to vector<8x128xf32>
    %140 = arith.mulf %137, %139 : vector<8x128xf32>
    %c0_47 = arith.constant 0 : index
    %c0_48 = arith.constant 0 : index
    %141 = vector.load %arg9[%c0_47, %c0_48] : memref<1x128xf32, #tpu.memory_space<vmem>>, vector<1x128xf32>
    %142 = vector.broadcast %141 : vector<1x128xf32> to vector<8x128xf32>
    %143 = arith.addf %140, %142 : vector<8x128xf32>
    %144 = arith.truncf %143 : vector<8x128xf32> to vector<8x128xbf16>
    %c0_49 = arith.constant 0 : index
    %c0_50 = arith.constant 0 : index
    %145 = vector.load %arg10[%c0_49, %c0_50] : memref<128x256xbf16, #tpu.memory_space<vmem>>, vector<128x256xbf16>
    %cst_51 = arith.constant dense<0.000000e+00> : vector<8x256xf32>
    %146 = tpu.matmul %144, %145, %cst_51 {dimension_numbers = #tpu.dot_dimension_numbers<[1], [0], [0], [1], [0, 0, 1, 1], [], []>} : vector<8x128xbf16>, vector<128x256xbf16>, vector<8x256xf32> -> vector<8x256xf32>
    %c0_52 = arith.constant 0 : index
    %c0_53 = arith.constant 0 : index
    %147 = vector.load %arg11[%c0_52, %c0_53] : memref<1x256xf32, #tpu.memory_space<vmem>>, vector<1x256xf32>
    %148 = vector.broadcast %147 : vector<1x256xf32> to vector<8x256xf32>
    %149 = arith.addf %146, %148 : vector<8x256xf32>
    %cst_54 = arith.constant 0.000000e+00 : f32
    %150 = vector.broadcast %cst_54 : f32 to vector<8x256xf32>
    %151 = arith.maximumf %149, %150 : vector<8x256xf32>
    %152 = arith.truncf %151 : vector<8x256xf32> to vector<8x256xbf16>
    %c0_55 = arith.constant 0 : index
    %c0_56 = arith.constant 0 : index
    %153 = vector.load %arg12[%c0_55, %c0_56] : memref<256x128xbf16, #tpu.memory_space<vmem>>, vector<256x128xbf16>
    %cst_57 = arith.constant dense<0.000000e+00> : vector<8x128xf32>
    %154 = tpu.matmul %152, %153, %cst_57 {dimension_numbers = #tpu.dot_dimension_numbers<[1], [0], [0], [1], [0, 0, 1, 1], [], []>} : vector<8x256xbf16>, vector<256x128xbf16>, vector<8x128xf32> -> vector<8x128xf32>
    %c0_58 = arith.constant 0 : index
    %c0_59 = arith.constant 0 : index
    %155 = vector.load %arg13[%c0_58, %c0_59] : memref<1x128xf32, #tpu.memory_space<vmem>>, vector<1x128xf32>
    %156 = vector.broadcast %155 : vector<1x128xf32> to vector<8x128xf32>
    %157 = arith.addf %154, %156 : vector<8x128xf32>
    %158 = arith.addf %119, %157 : vector<8x128xf32>
    %159 = arith.truncf %158 : vector<8x128xf32> to vector<8x128xbf16>
    %c0_60 = arith.constant 0 : index
    %c0_61 = arith.constant 0 : index
    %c0_62 = arith.constant 0 : index
    %160 = vector.load %arg14[%c0_60, %c0_61, %c0_62] : memref<1x8x128xbf16, #tpu.memory_space<vmem>>, vector<1x8x128xbf16>
    %161 = vector.shape_cast %160 : vector<1x8x128xbf16> to vector<8x128xbf16>
    %162 = vector.shape_cast %159 : vector<8x128xbf16> to vector<1x8x128xbf16>
    tpu.vector_store %arg14[%c0_60, %c0_61, %c0_62], %162 {strides = array<i32>} : memref<1x8x128xbf16, #tpu.memory_space<vmem>>, vector<1x8x128xbf16>,
    return
  }
  func.func @transform_0(%arg0: i32) -> (i32, i32, i32) {
    %c0_i32 = arith.constant 0 : i32
    %c0_i32_0 = arith.constant 0 : i32
    %c0_i32_1 = arith.constant 0 : i32
    return %arg0, %c0_i32, %c0_i32_0 : i32, i32, i32
  }
  func.func @transform_1(%arg0: i32) -> (i32, i32) {
    %c0_i32 = arith.constant 0 : i32
    %c0_i32_0 = arith.constant 0 : i32
    %c0_i32_1 = arith.constant 0 : i32
    return %c0_i32, %c0_i32_0 : i32, i32
  }
  func.func @transform_2(%arg0: i32) -> (i32, i32) {
    %c0_i32 = arith.constant 0 : i32
    %c0_i32_0 = arith.constant 0 : i32
    %c0_i32_1 = arith.constant 0 : i32
    return %c0_i32, %c0_i32_0 : i32, i32
  }
  func.func @transform_3(%arg0: i32) -> (i32, i32) {
    %c0_i32 = arith.constant 0 : i32
    %c0_i32_0 = arith.constant 0 : i32
    %c0_i32_1 = arith.constant 0 : i32
    return %c0_i32, %c0_i32_0 : i32, i32
  }
  func.func @transform_4(%arg0: i32) -> (i32, i32) {
    %c0_i32 = arith.constant 0 : i32
    %c0_i32_0 = arith.constant 0 : i32
    %c0_i32_1 = arith.constant 0 : i32
    return %c0_i32, %c0_i32_0 : i32, i32
  }
  func.func @transform_5(%arg0: i32) -> (i32, i32) {
    %c0_i32 = arith.constant 0 : i32
    %c0_i32_0 = arith.constant 0 : i32
    %c0_i32_1 = arith.constant 0 : i32
    return %c0_i32, %c0_i32_0 : i32, i32
  }
  func.func @transform_6(%arg0: i32) -> (i32, i32) {
    %c0_i32 = arith.constant 0 : i32
    %c0_i32_0 = arith.constant 0 : i32
    %c0_i32_1 = arith.constant 0 : i32
    return %c0_i32, %c0_i32_0 : i32, i32
  }
  func.func @transform_7(%arg0: i32) -> (i32, i32) {
    %c0_i32 = arith.constant 0 : i32
    %c0_i32_0 = arith.constant 0 : i32
    %c0_i32_1 = arith.constant 0 : i32
    return %c0_i32, %c0_i32_0 : i32, i32
  }
  func.func @transform_8(%arg0: i32) -> (i32, i32) {
    %c0_i32 = arith.constant 0 : i32
    %c0_i32_0 = arith.constant 0 : i32
    %c0_i32_1 = arith.constant 0 : i32
    return %c0_i32, %c0_i32_0 : i32, i32
  }
  func.func @transform_9(%arg0: i32) -> (i32, i32) {
    %c0_i32 = arith.constant 0 : i32
    %c0_i32_0 = arith.constant 0 : i32
    %c0_i32_1 = arith.constant 0 : i32
    return %c0_i32, %c0_i32_0 : i32, i32
  }
  func.func @transform_10(%arg0: i32) -> (i32, i32) {
    %c0_i32 = arith.constant 0 : i32
    %c0_i32_0 = arith.constant 0 : i32
    %c0_i32_1 = arith.constant 0 : i32
    return %c0_i32, %c0_i32_0 : i32, i32
  }
  func.func @transform_11(%arg0: i32) -> (i32, i32) {
    %c0_i32 = arith.constant 0 : i32
    %c0_i32_0 = arith.constant 0 : i32
    %c0_i32_1 = arith.constant 0 : i32
    return %c0_i32, %c0_i32_0 : i32, i32
  }
  func.func @transform_12(%arg0: i32) -> (i32, i32) {
    %c0_i32 = arith.constant 0 : i32
    %c0_i32_0 = arith.constant 0 : i32
    %c0_i32_1 = arith.constant 0 : i32
    return %c0_i32, %c0_i32_0 : i32, i32
  }
  func.func @transform_13(%arg0: i32) -> (i32, i32, i32) {
    %c0_i32 = arith.constant 0 : i32
    %c0_i32_0 = arith.constant 0 : i32
    %c0_i32_1 = arith.constant 0 : i32
    return %arg0, %c0_i32, %c0_i32_0 : i32, i32, i32
  }
}

</mosaic_0001>

<llo_original>
// kernel: transformer_encoder_layer.1
$region0: #{transformer_encoder_layer.1}
  #allocation0 [shape = 'u32[]', space=smem, size = 0x4, offset = 0x4, fixed_abs, tag = 'smem constant byte address 0x4 - core index']
  #allocation1 [shape = 'u32[144,128]{1,0:T(1,128)}', space=vmem, size = 0x12000, scoped, tag = 'internal scratch']
  %s0 = inlined_call_operand.hbm [shape: bf16[2,8,128], index: 0, kind: input, shape index: {}, may-alias: {0,13}]
  %s1 = inlined_call_operand.vmem [shape: f32[1,128], index: 1, kind: input, shape index: {}]
  %s2 = inlined_call_operand.vmem [shape: f32[1,128], index: 2, kind: input, shape index: {}]
  %s3 = inlined_call_operand.hbm [shape: bf16[128,384], index: 3, kind: input, shape index: {}]
  %s4 = inlined_call_operand.vmem [shape: f32[1,384], index: 4, kind: input, shape index: {}]
  %s5 = inlined_call_operand.hbm [shape: bf16[128,128], index: 5, kind: input, shape index: {}]
  %s6 = inlined_call_operand.vmem [shape: f32[1,128], index: 6, kind: input, shape index: {}]
  %s7 = inlined_call_operand.vmem [shape: f32[1,128], index: 7, kind: input, shape index: {}]
  %s8 = inlined_call_operand.vmem [shape: f32[1,128], index: 8, kind: input, shape index: {}]
  %s9 = inlined_call_operand.hbm [shape: bf16[128,256], index: 9, kind: input, shape index: {}]
  %s10 = inlined_call_operand.vmem [shape: f32[1,256], index: 10, kind: input, shape index: {}]
  %s11 = inlined_call_operand.hbm [shape: bf16[256,128], index: 11, kind: input, shape index: {}]
  %s12 = inlined_call_operand.vmem [shape: f32[1,128], index: 12, kind: input, shape index: {}]
  %s13 = inlined_call_operand.hbm [shape: bf16[2,8,128], index: 13, kind: output, shape index: {}, may-alias: {0,13}]
  %s14 = sld [smem:[#allocation0]]
  $region105: #{transformer_encoder_layer.1} parent=0
    _
  %s16 = ssub.s32 1, %s14
  %s17 = scalar_select 0, %s16, %s14
  $region1: #{transformer_encoder_layer.1} parent=0
    #allocation2 [shape = 'u8[4096]{0}', space=vmem, size = 0x1000, scoped, tag = 'input window, operand 0']
    #allocation3 [shape = 's32[2]{0}', space=sflag, size = 0x8, scoped, tag = 'scoped memory for transformer_encoder_layer.1']
    #allocation4 [shape = 's32[2]{0}', space=sflag, size = 0x8, scoped, tag = 'scoped memory for transformer_encoder_layer.1']
    #allocation5 [shape = 'u8[98304]{0}', space=vmem, size = 0x18000, scoped, tag = 'input window, operand 3, single buffered']
    #allocation6 [shape = 's32[1]{0}', space=sflag, size = 0x4, scoped, tag = 'scoped memory for transformer_encoder_layer.1']
    #allocation7 [shape = 'u8[32768]{0}', space=vmem, size = 0x8000, scoped, tag = 'input window, operand 5, single buffered']
    #allocation8 [shape = 'u8[65536]{0}', space=vmem, size = 0x10000, scoped, tag = 'input window, operand 9, single buffered']
    #allocation9 [shape = 's32[1]{0}', space=sflag, size = 0x4, scoped, tag = 'scoped memory for transformer_encoder_layer.1']
    #allocation10 [shape = 'u8[65536]{0}', space=vmem, size = 0x10000, scoped, tag = 'input window, operand 11, single buffered']
    #allocation11 [shape = 'u8[4096]{0}', space=vmem, size = 0x1000, scoped, tag = 'output window, operand 0']
    %18 = vsyncpa [#allocation3], 0
    %s19 = scalar_lea.sflag [#allocation3], 1
    %20 = vsyncpa %s19, 0
    %21 = vsyncpa [#allocation6], 0
    %22 = vsyncpa [#allocation9], 0
    %23 = vsyncpa [#allocation4], 0
    %s24 = scalar_lea.sflag [#allocation4], 1
    %25 = vsyncpa %s24, 0
    loop: start=0, step=1, limit=4
    $region2: #{transformer_encoder_layer.1} parent=1 // loop_pre_header
      _
    $region3: #{transformer_encoder_layer.1} parent=1 // loop_header
      %s27 = sphi 0, %s31
      %p28 = scmp.ge.s32.totalorder %s27, 4
      %s37 = sphi 0, %s39
      %s40 = sphi 0, %s37
      %s41 = sphi 0, %s40
      %s57 = sphi 0, %s41
      %s61 = sphi 0, %s61
      %s63 = sphi 0, %s61
      %s64 = sphi 0, %s63
      %s78 = sphi 0, %s64
      %s82 = sphi 0, %s82
      %s84 = sphi 0, %s82
      %s85 = sphi 0, %s84
      %s99 = sphi 0, %s85
      %s103 = sphi 0, %s103
      %s105 = sphi 0, %s103
      %s106 = sphi 0, %s105
      %s120 = sphi 0, %s106
      %s124 = sphi 0, %s124
      %s126 = sphi 0, %s124
      %s127 = sphi 0, %s126
      %s141 = sphi 0, %s127
      %s145 = sphi 0, %s145
      %s147 = sphi 0, %s145
      %s148 = sphi 0, %s147
      %s162 = sphi 0, %s148
      %s166 = sphi 0, %s166
      %s168 = sphi 0, %s166
      %s169 = sphi 0, %s168
      %s183 = sphi 0, %s169
      %s187 = sphi 0, %s187
      %s189 = sphi 0, %s187
      %s190 = sphi 0, %s189
      %s204 = sphi 0, %s190
      %s208 = sphi 0, %s208
      %s210 = sphi 0, %s208
      %s211 = sphi 0, %s210
      %s225 = sphi 0, %s211
      %s229 = sphi 0, %s229
      %s231 = sphi 0, %s229
      %s232 = sphi 0, %s231
      %s246 = sphi 0, %s232
      %s250 = sphi 0, %s250
      %s252 = sphi 0, %s250
      %s253 = sphi 0, %s252
      %s267 = sphi 0, %s253
      %s271 = sphi 0, %s271
      %s273 = sphi 0, %s271
      %s274 = sphi 0, %s273
      %s288 = sphi 0, %s274
      %s292 = sphi 0, %s292
      %s294 = sphi 0, %s292
      %s295 = sphi 0, %s294
      %s309 = sphi 0, %s295
      %s315 = sphi 0, %s317
      %s318 = sphi 0, %s315
      %s319 = sphi 0, %s318
      %s335 = sphi 0, %s319
    $region4: #{transformer_encoder_layer.1} parent=1 // loop_header_branch
      %30 = sbr.rel (%p28) target = $region8
    $region5: #{transformer_encoder_layer.1} parent=1 // loop_body
      %s32 = ssub.s32 %s27, 1
      %s33 = ssub.s32 %s27, 2
      %s34 = sadd.s32 %s27, 1
      %s35 = ssub.s32 %s27, %s34
      %p36 = scmp.eq.s32.totalorder %s35, 0
      %s38 = sadd.s32 %s37, 1
      %s39 = scalar_select %p36, %s37, %s38
      %p42 = pneg %p36
      %p43 = scmp.eq.s32.totalorder %s27, 1
      %p44 = por %p42, %p43
      %p45 = scmp.ne.s32.totalorder %s37, %s40
      %p46 = scmp.eq.s32.totalorder %s27, 0
      %p47 = por %p45, %p46
      %p48 = scmp.ne.s32.totalorder %s37, %s40
      %p49 = scmp.eq.s32.totalorder %s32, 1
      %p50 = por %p48, %p49
      %p51 = scmp.ne.s32.totalorder %s40, %s41
      %p52 = scmp.eq.s32.totalorder %s32, 0
      %p53 = por %p51, %p52
      %p54 = scmp.ne.s32.totalorder %s40, %s41
      %p55 = scmp.eq.s32.totalorder %s33, 1
      %p56 = por %p54, %p55
      %p58 = scmp.ne.s32.totalorder %s41, %s57
      %p59 = scmp.eq.s32.totalorder %s33, 0
      %p60 = por %p58, %p59
      %s62 = sadd.s32 %s61, 1
      %p65 = scmp.eq.s32.totalorder %s27, 1
      %p66 = scmp.ne.s32.totalorder %s61, %s63
      %p67 = scmp.eq.s32.totalorder %s27, 0
      %p68 = por %p66, %p67
      %p69 = scmp.ne.s32.totalorder %s61, %s63
      %p70 = scmp.eq.s32.totalorder %s32, 1
      %p71 = por %p69, %p70
      %p72 = scmp.ne.s32.totalorder %s63, %s64
      %p73 = scmp.eq.s32.totalorder %s32, 0
      %p74 = por %p72, %p73
      %p75 = scmp.ne.s32.totalorder %s63, %s64
      %p76 = scmp.eq.s32.totalorder %s33, 1
      %p77 = por %p75, %p76
      %p79 = scmp.ne.s32.totalorder %s64, %s78
      %p80 = scmp.eq.s32.totalorder %s33, 0
      %p81 = por %p79, %p80
      %s83 = sadd.s32 %s82, 1
      %p86 = scmp.eq.s32.totalorder %s27, 1
      %p87 = scmp.ne.s32.totalorder %s82, %s84
      %p88 = scmp.eq.s32.totalorder %s27, 0
      %p89 = por %p87, %p88
      %p90 = scmp.ne.s32.totalorder %s82, %s84
      %p91 = scmp.eq.s32.totalorder %s32, 1
      %p92 = por %p90, %p91
      %p93 = scmp.ne.s32.totalorder %s84, %s85
      %p94 = scmp.eq.s32.totalorder %s32, 0
      %p95 = por %p93, %p94
      %p96 = scmp.ne.s32.totalorder %s84, %s85
      %p97 = scmp.eq.s32.totalorder %s33, 1
      %p98 = por %p96, %p97
      %p100 = scmp.ne.s32.totalorder %s85, %s99
      %p101 = scmp.eq.s32.totalorder %s33, 0
      %p102 = por %p100, %p101
      %s104 = sadd.s32 %s103, 1
      %p107 = scmp.eq.s32.totalorder %s27, 1
      %p108 = scmp.ne.s32.totalorder %s103, %s105
      %p109 = scmp.eq.s32.totalorder %s27, 0
      %p110 = por %p108, %p109
      %p111 = scmp.ne.s32.totalorder %s103, %s105
      %p112 = scmp.eq.s32.totalorder %s32, 1
      %p113 = por %p111, %p112
      %p114 = scmp.ne.s32.totalorder %s105, %s106
      %p115 = scmp.eq.s32.totalorder %s32, 0
      %p116 = por %p114, %p115
      %p117 = scmp.ne.s32.totalorder %s105, %s106
      %p118 = scmp.eq.s32.totalorder %s33, 1
      %p119 = por %p117, %p118
      %p121 = scmp.ne.s32.totalorder %s106, %s120
      %p122 = scmp.eq.s32.totalorder %s33, 0
      %p123 = por %p121, %p122
      %s125 = sadd.s32 %s124, 1
      %p128 = scmp.eq.s32.totalorder %s27, 1
      %p129 = scmp.ne.s32.totalorder %s124, %s126
      %p130 = scmp.eq.s32.totalorder %s27, 0
      %p131 = por %p129, %p130
      %p132 = scmp.ne.s32.totalorder %s124, %s126
      %p133 = scmp.eq.s32.totalorder %s32, 1
      %p134 = por %p132, %p133
      %p135 = scmp.ne.s32.totalorder %s126, %s127
      %p136 = scmp.eq.s32.totalorder %s32, 0
      %p137 = por %p135, %p136
      %p138 = scmp.ne.s32.totalorder %s126, %s127
      %p139 = scmp.eq.s32.totalorder %s33, 1
      %p140 = por %p138, %p139
      %p142 = scmp.ne.s32.totalorder %s127, %s141
      %p143 = scmp.eq.s32.totalorder %s33, 0
      %p144 = por %p142, %p143
      %s146 = sadd.s32 %s145, 1
      %p149 = scmp.eq.s32.totalorder %s27, 1
      %p150 = scmp.ne.s32.totalorder %s145, %s147
      %p151 = scmp.eq.s32.totalorder %s27, 0
      %p152 = por %p150, %p151
      %p153 = scmp.ne.s32.totalorder %s145, %s147
      %p154 = scmp.eq.s32.totalorder %s32, 1
      %p155 = por %p153, %p154
      %p156 = scmp.ne.s32.totalorder %s147, %s148
      %p157 = scmp.eq.s32.totalorder %s32, 0
      %p158 = por %p156, %p157
      %p159 = scmp.ne.s32.totalorder %s147, %s148
      %p160 = scmp.eq.s32.totalorder %s33, 1
      %p161 = por %p159, %p160
      %p163 = scmp.ne.s32.totalorder %s148, %s162
      %p164 = scmp.eq.s32.totalorder %s33, 0
      %p165 = por %p163, %p164
      %s167 = sadd.s32 %s166, 1
      %p170 = scmp.eq.s32.totalorder %s27, 1
      %p171 = scmp.ne.s32.totalorder %s166, %s168
      %p172 = scmp.eq.s32.totalorder %s27, 0
      %p173 = por %p171, %p172
      %p174 = scmp.ne.s32.totalorder %s166, %s168
      %p175 = scmp.eq.s32.totalorder %s32, 1
      %p176 = por %p174, %p175
      %p177 = scmp.ne.s32.totalorder %s168, %s169
      %p178 = scmp.eq.s32.totalorder %s32, 0
      %p179 = por %p177, %p178
      %p180 = scmp.ne.s32.totalorder %s168, %s169
      %p181 = scmp.eq.s32.totalorder %s33, 1
      %p182 = por %p180, %p181
      %p184 = scmp.ne.s32.totalorder %s169, %s183
      %p185 = scmp.eq.s32.totalorder %s33, 0
      %p186 = por %p184, %p185
      %s188 = sadd.s32 %s187, 1
      %p191 = scmp.eq.s32.totalorder %s27, 1
      %p192 = scmp.ne.s32.totalorder %s187, %s189
      %p193 = scmp.eq.s32.totalorder %s27, 0
      %p194 = por %p192, %p193
      %p195 = scmp.ne.s32.totalorder %s187, %s189
      %p196 = scmp.eq.s32.totalorder %s32, 1
      %p197 = por %p195, %p196
      %p198 = scmp.ne.s32.totalorder %s189, %s190
      %p199 = scmp.eq.s32.totalorder %s32, 0
      %p200 = por %p198, %p199
      %p201 = scmp.ne.s32.totalorder %s189, %s190
      %p202 = scmp.eq.s32.totalorder %s33, 1
      %p203 = por %p201, %p202
      %p205 = scmp.ne.s32.totalorder %s190, %s204
      %p206 = scmp.eq.s32.totalorder %s33, 0
      %p207 = por %p205, %p206
      %s209 = sadd.s32 %s208, 1
      %p212 = scmp.eq.s32.totalorder %s27, 1
      %p213 = scmp.ne.s32.totalorder %s208, %s210
      %p214 = scmp.eq.s32.totalorder %s27, 0
      %p215 = por %p213, %p214
      %p216 = scmp.ne.s32.totalorder %s208, %s210
      %p217 = scmp.eq.s32.totalorder %s32, 1
      %p218 = por %p216, %p217
      %p219 = scmp.ne.s32.totalorder %s210, %s211
      %p220 = scmp.eq.s32.totalorder %s32, 0
      %p221 = por %p219, %p220
      %p222 = scmp.ne.s32.totalorder %s210, %s211
      %p223 = scmp.eq.s32.totalorder %s33, 1
      %p224 = por %p222, %p223
      %p226 = scmp.ne.s32.totalorder %s211, %s225
      %p227 = scmp.eq.s32.totalorder %s33, 0
      %p228 = por %p226, %p227
      %s230 = sadd.s32 %s229, 1
      %p233 = scmp.eq.s32.totalorder %s27, 1
      %p234 = scmp.ne.s32.totalorder %s229, %s231
      %p235 = scmp.eq.s32.totalorder %s27, 0
      %p236 = por %p234, %p235
      %p237 = scmp.ne.s32.totalorder %s229, %s231
      %p238 = scmp.eq.s32.totalorder %s32, 1
      %p239 = por %p237, %p238
      %p240 = scmp.ne.s32.totalorder %s231, %s232
      %p241 = scmp.eq.s32.totalorder %s32, 0
      %p242 = por %p240, %p241
      %p243 = scmp.ne.s32.totalorder %s231, %s232
      %p244 = scmp.eq.s32.totalorder %s33, 1
      %p245 = por %p243, %p244
      %p247 = scmp.ne.s32.totalorder %s232, %s246
      %p248 = scmp.eq.s32.totalorder %s33, 0
      %p249 = por %p247, %p248
      %s251 = sadd.s32 %s250, 1
      %p254 = scmp.eq.s32.totalorder %s27, 1
      %p255 = scmp.ne.s32.totalorder %s250, %s252
      %p256 = scmp.eq.s32.totalorder %s27, 0
      %p257 = por %p255, %p256
      %p258 = scmp.ne.s32.totalorder %s250, %s252
      %p259 = scmp.eq.s32.totalorder %s32, 1
      %p260 = por %p258, %p259
      %p261 = scmp.ne.s32.totalorder %s252, %s253
      %p262 = scmp.eq.s32.totalorder %s32, 0
      %p263 = por %p261, %p262
      %p264 = scmp.ne.s32.totalorder %s252, %s253
      %p265 = scmp.eq.s32.totalorder %s33, 1
      %p266 = por %p264, %p265
      %p268 = scmp.ne.s32.totalorder %s253, %s267
      %p269 = scmp.eq.s32.totalorder %s33, 0
      %p270 = por %p268, %p269
      %s272 = sadd.s32 %s271, 1
      %p275 = scmp.eq.s32.totalorder %s27, 1
      %p276 = scmp.ne.s32.totalorder %s271, %s273
      %p277 = scmp.eq.s32.totalorder %s27, 0
      %p278 = por %p276, %p277
      %p279 = scmp.ne.s32.totalorder %s271, %s273
      %p280 = scmp.eq.s32.totalorder %s32, 1
      %p281 = por %p279, %p280
      %p282 = scmp.ne.s32.totalorder %s273, %s274
      %p283 = scmp.eq.s32.totalorder %s32, 0
      %p284 = por %p282, %p283
      %p285 = scmp.ne.s32.totalorder %s273, %s274
      %p286 = scmp.eq.s32.totalorder %s33, 1
      %p287 = por %p285, %p286
      %p289 = scmp.ne.s32.totalorder %s274, %s288
      %p290 = scmp.eq.s32.totalorder %s33, 0
      %p291 = por %p289, %p290
      %s293 = sadd.s32 %s292, 1
      %p296 = scmp.eq.s32.totalorder %s27, 1
      %p297 = scmp.ne.s32.totalorder %s292, %s294
      %p298 = scmp.eq.s32.totalorder %s27, 0
      %p299 = por %p297, %p298
      %p300 = scmp.ne.s32.totalorder %s292, %s294
      %p301 = scmp.eq.s32.totalorder %s32, 1
      %p302 = por %p300, %p301
      %p303 = scmp.ne.s32.totalorder %s294, %s295
      %p304 = scmp.eq.s32.totalorder %s32, 0
      %p305 = por %p303, %p304
      %p306 = scmp.ne.s32.totalorder %s294, %s295
      %p307 = scmp.eq.s32.totalorder %s33, 1
      %p308 = por %p306, %p307
      %p310 = scmp.ne.s32.totalorder %s295, %s309
      %p311 = scmp.eq.s32.totalorder %s33, 0
      %p312 = por %p310, %p311
      %s313 = ssub.s32 %s27, %s34
      %p314 = scmp.eq.s32.totalorder %s313, 0
      %s316 = sadd.s32 %s315, 1
      %s317 = scalar_select %p314, %s315, %s316
      %p320 = pneg %p314
      %p321 = scmp.eq.s32.totalorder %s27, 1
      %p322 = por %p320, %p321
      %p323 = scmp.ne.s32.totalorder %s315, %s318
      %p324 = scmp.eq.s32.totalorder %s27, 0
      %p325 = por %p323, %p324
      %p326 = scmp.ne.s32.totalorder %s315, %s318
      %p327 = scmp.eq.s32.totalorder %s32, 1
      %p328 = por %p326, %p327
      %p329 = scmp.ne.s32.totalorder %s318, %s319
      %p330 = scmp.eq.s32.totalorder %s32, 0
      %p331 = por %p329, %p330
      %p332 = scmp.ne.s32.totalorder %s318, %s319
      %p333 = scmp.eq.s32.totalorder %s33, 1
      %p334 = por %p332, %p333
      %p336 = scmp.ne.s32.totalorder %s319, %s335
      %p337 = scmp.eq.s32.totalorder %s33, 0
      %p338 = por %p336, %p337
      %p339 = scmp.le.s32.totalorder 1, %s27
      %p340 = scmp.lt.s32.totalorder %s27, 3
      %p341 = pnand %p339, %p340
      %p342 = pneg %p341
      // Predicated region
      $region9: #{transformer_encoder_layer.1} parent=5 // pred_check
        _
      $region10: #{transformer_encoder_layer.1} parent=5 // pred_check_branch
        %344 = sbr.rel (%p341) target = $region12
      $region11: #{transformer_encoder_layer.1} parent=5 // pred_region
        %s345 = ssub.s32 %s27, 1
        // Predicated region
        $region13: #{transformer_encoder_layer.1} parent=11 // pred_check
          %p346 = pneg %p74
        $region14: #{transformer_encoder_layer.1} parent=11 // pred_check_branch
          %348 = sbr.rel (%p346) target = $region16
        $region15: #{transformer_encoder_layer.1} parent=11 // pred_region
          _
        $region16: #{transformer_encoder_layer.1} parent=11 // pred_fallthru
          _
        // Predicated region
        $region17: #{transformer_encoder_layer.1} parent=11 // pred_check
          %p349 = pneg %p95
        $region18: #{transformer_encoder_layer.1} parent=11 // pred_check_branch
          %351 = sbr.rel (%p349) target = $region20
        $region19: #{transformer_encoder_layer.1} parent=11 // pred_region
          _
        $region20: #{transformer_encoder_layer.1} parent=11 // pred_fallthru
          _
        // Predicated region
        $region21: #{transformer_encoder_layer.1} parent=11 // pred_check
          %p352 = pneg %p116
        $region22: #{transformer_encoder_layer.1} parent=11 // pred_check_branch
          %354 = sbr.rel (%p352) target = $region24
        $region23: #{transformer_encoder_layer.1} parent=11 // pred_region
          %s356 = ssub.s32 3072, 3072
          %357 = vsyncadd [#allocation6], %s356
          %s358 = sshll.u32 [#allocation5], 4
          %s359 = int_to_ptr.vmem [resolvable:$true] %s358
          %364 = dma.hbm_to_vmem [thread:$0]  %s3, 3072, %s359, [#allocation6], 192, 192, 12
        $region24: #{transformer_encoder_layer.1} parent=11 // pred_fallthru
          _
        // Predicated region
        $region25: #{transformer_encoder_layer.1} parent=11 // pred_check
          %p365 = pneg %p137
        $region26: #{transformer_encoder_layer.1} parent=11 // pred_check_branch
          %367 = sbr.rel (%p365) target = $region28
        $region27: #{transformer_encoder_layer.1} parent=11 // pred_region
          _
        $region28: #{transformer_encoder_layer.1} parent=11 // pred_fallthru
          _
        // Predicated region
        $region29: #{transformer_encoder_layer.1} parent=11 // pred_check
          %p368 = pneg %p158
        $region30: #{transformer_encoder_layer.1} parent=11 // pred_check_branch
          %370 = sbr.rel (%p368) target = $region32
        $region31: #{transformer_encoder_layer.1} parent=11 // pred_region
          %s372 = ssub.s32 1024, 1024
          %373 = vsyncadd [#allocation6], %s372
          %s374 = sshll.u32 [#allocation7], 4
          %s375 = int_to_ptr.vmem [resolvable:$true] %s374
          %380 = dma.hbm_to_vmem [thread:$0]  %s5, 1024, %s375, [#allocation6], 64, 64, 4
        $region32: #{transformer_encoder_layer.1} parent=11 // pred_fallthru
          _
        // Predicated region
        $region33: #{transformer_encoder_layer.1} parent=11 // pred_check
          %p381 = pneg %p179
        $region34: #{transformer_encoder_layer.1} parent=11 // pred_check_branch
          %383 = sbr.rel (%p381) target = $region36
        $region35: #{transformer_encoder_layer.1} parent=11 // pred_region
          _
        $region36: #{transformer_encoder_layer.1} parent=11 // pred_fallthru
          _
        // Predicated region
        $region37: #{transformer_encoder_layer.1} parent=11 // pred_check
          %p384 = pneg %p200
        $region38: #{transformer_encoder_layer.1} parent=11 // pred_check_branch
          %386 = sbr.rel (%p384) target = $region40
        $region39: #{transformer_encoder_layer.1} parent=11 // pred_region
          _
        $region40: #{transformer_encoder_layer.1} parent=11 // pred_fallthru
          _
        // Predicated region
        $region41: #{transformer_encoder_layer.1} parent=11 // pred_check
          %p387 = pneg %p221
        $region42: #{transformer_encoder_layer.1} parent=11 // pred_check_branch
          %389 = sbr.rel (%p387) target = $region44
        $region43: #{transformer_encoder_layer.1} parent=11 // pred_region
          _
        $region44: #{transformer_encoder_layer.1} parent=11 // pred_fallthru
          _
        // Predicated region
        $region45: #{transformer_encoder_layer.1} parent=11 // pred_check
          %p390 = pneg %p242
        $region46: #{transformer_encoder_layer.1} parent=11 // pred_check_branch
          %392 = sbr.rel (%p390) target = $region48
        $region47: #{transformer_encoder_layer.1} parent=11 // pred_region
          %s394 = ssub.s32 2048, 2048
          %395 = vsyncadd [#allocation9], %s394
          %s396 = sshll.u32 [#allocation8], 4
          %s397 = int_to_ptr.vmem [resolvable:$true] %s396
          %402 = dma.hbm_to_vmem [thread:$0]  %s9, 2048, %s397, [#allocation9], 128, 128, 8
        $region48: #{transformer_encoder_layer.1} parent=11 // pred_fallthru
          _
        // Predicated region
        $region49: #{transformer_encoder_layer.1} parent=11 // pred_check
          %p403 = pneg %p263
        $region50: #{transformer_encoder_layer.1} parent=11 // pred_check_branch
          %405 = sbr.rel (%p403) target = $region52
        $region51: #{transformer_encoder_layer.1} parent=11 // pred_region
          _
        $region52: #{transformer_encoder_layer.1} parent=11 // pred_fallthru
          _
        // Predicated region
        $region53: #{transformer_encoder_layer.1} parent=11 // pred_check
          %p406 = pneg %p284
        $region54: #{transformer_encoder_layer.1} parent=11 // pred_check_branch
          %408 = sbr.rel (%p406) target = $region56
        $region55: #{transformer_encoder_layer.1} parent=11 // pred_region
          %s410 = ssub.s32 2048, 2048
          %411 = vsyncadd [#allocation9], %s410
          %s412 = sshll.u32 [#allocation10], 4
          %s413 = int_to_ptr.vmem [resolvable:$true] %s412
          %418 = dma.hbm_to_vmem [thread:$0]  %s11, 2048, %s413, [#allocation9], 64, 64, 4
        $region56: #{transformer_encoder_layer.1} parent=11 // pred_fallthru
          _
        // Predicated region
        $region57: #{transformer_encoder_layer.1} parent=11 // pred_check
          %p419 = pneg %p305
        $region58: #{transformer_encoder_layer.1} parent=11 // pred_check_branch
          %421 = sbr.rel (%p419) target = $region60
        $region59: #{transformer_encoder_layer.1} parent=11 // pred_region
          _
        $region60: #{transformer_encoder_layer.1} parent=11 // pred_fallthru
          _
      $region12: #{transformer_encoder_layer.1} parent=5 // pred_fallthru
        _
      %p422 = scmp.lt.s32.totalorder %s27, 2
      // Predicated region
      $region61: #{transformer_encoder_layer.1} parent=5 // pred_check
        %p423 = pneg %p422
      $region62: #{transformer_encoder_layer.1} parent=5 // pred_check_branch
        %425 = sbr.rel (%p423) target = $region64
      $region63: #{transformer_encoder_layer.1} parent=5 // pred_region
        // Predicated region
        $region65: #{transformer_encoder_layer.1} parent=63 // pred_check
          %p426 = pneg %p47
        $region66: #{transformer_encoder_layer.1} parent=63 // pred_check_branch
          %428 = sbr.rel (%p426) target = $region68
        $region67: #{transformer_encoder_layer.1} parent=63 // pred_region
          %s429 = sand.u32 %s37, 1
          %s430 = scalar_lea.sflag [#allocation3], %s429
          %s431 = sand.u32 %s37, 1
          %s432 = smul.addr %s431, 4
          %s433 = scalar_lea.vmem [#allocation2], %s432
          %s435 = ssub.s32 64, 64
          %436 = vsyncadd %s430, %s435
          %s437 = smul.addr %s27, 64
          %s438 = scalar_lea.hbm %s0, %s437
          %s440 = sshll.u32 %s433, 4
          %s441 = int_to_ptr.vmem [resolvable:$true] %s440
          %443 = dma.hbm_to_vmem [thread:$0]  %s438, 64, %s441, %s430
        $region68: #{transformer_encoder_layer.1} parent=63 // pred_fallthru
          _
      $region64: #{transformer_encoder_layer.1} parent=5 // pred_fallthru
        _
      %p444 = scmp.le.s32.totalorder 1, %s27
      %p445 = scmp.lt.s32.totalorder %s27, 3
      %p446 = pnand %p444, %p445
      %p447 = pneg %p446
      // Predicated region
      $region69: #{transformer_encoder_layer.1} parent=5 // pred_check
        _
      $region70: #{transformer_encoder_layer.1} parent=5 // pred_check_branch
        %449 = sbr.rel (%p446) target = $region72
      $region71: #{transformer_encoder_layer.1} parent=5 // pred_region
        %s450 = ssub.s32 %s27, 1
        %s451 = sand.u32 %s40, 1
        %s452 = scalar_lea.sflag [#allocation3], %s451
        %s453 = sand.u32 %s40, 1
        %s454 = smul.addr %s453, 4
        %s455 = scalar_lea.vmem [#allocation2], %s454
        // Predicated region
        $region73: #{transformer_encoder_layer.1} parent=71 // pred_check
          %p456 = pneg %p53
        $region74: #{transformer_encoder_layer.1} parent=71 // pred_check_branch
          %458 = sbr.rel (%p456) target = $region76
        $region75: #{transformer_encoder_layer.1} parent=71 // pred_region
          %459 = dma.done %s452, 64
        $region76: #{transformer_encoder_layer.1} parent=71 // pred_fallthru
          _
        // Predicated region
        $region77: #{transformer_encoder_layer.1} parent=71 // pred_check
          %p460 = pneg %p116
        $region78: #{transformer_encoder_layer.1} parent=71 // pred_check_branch
          %462 = sbr.rel (%p460) target = $region80
        $region79: #{transformer_encoder_layer.1} parent=71 // pred_region
          %463 = dma.done [#allocation6], 3072
        $region80: #{transformer_encoder_layer.1} parent=71 // pred_fallthru
          _
        // Predicated region
        $region81: #{transformer_encoder_layer.1} parent=71 // pred_check
          %p464 = pneg %p158
        $region82: #{transformer_encoder_layer.1} parent=71 // pred_check_branch
          %466 = sbr.rel (%p464) target = $region84
        $region83: #{transformer_encoder_layer.1} parent=71 // pred_region
          %467 = dma.done [#allocation6], 1024
        $region84: #{transformer_encoder_layer.1} parent=71 // pred_fallthru
          _
        // Predicated region
        $region85: #{transformer_encoder_layer.1} parent=71 // pred_check
          %p468 = pneg %p242
        $region86: #{transformer_encoder_layer.1} parent=71 // pred_check_branch
          %470 = sbr.rel (%p468) target = $region88
        $region87: #{transformer_encoder_layer.1} parent=71 // pred_region
          %471 = dma.done [#allocation9], 2048
        $region88: #{transformer_encoder_layer.1} parent=71 // pred_fallthru
          _
        // Predicated region
        $region89: #{transformer_encoder_layer.1} parent=71 // pred_check
          %p472 = pneg %p284
        $region90: #{transformer_encoder_layer.1} parent=71 // pred_check_branch
          %474 = sbr.rel (%p472) target = $region92
        $region91: #{transformer_encoder_layer.1} parent=71 // pred_region
          %475 = dma.done [#allocation9], 2048
        $region92: #{transformer_encoder_layer.1} parent=71 // pred_fallthru
          _
        %s476 = sand.u32 %s40, 1
        %s477 = scalar_lea.sflag [#allocation3], %s476
        %s478 = sand.u32 %s40, 1
        %s479 = smul.addr %s478, 4
        %s480 = scalar_lea.vmem [#allocation2], %s479
        %p481 = pneg %p53
        %p482 = pneg %p50
        %p483 = pneg %p74
        %p484 = pneg %p71
        %p485 = pneg %p95
        %p486 = pneg %p92
        %p487 = pneg %p116
        %p488 = pneg %p113
        %p489 = pneg %p137
        %p490 = pneg %p134
        %p491 = pneg %p158
        %p492 = pneg %p155
        %p493 = pneg %p179
        %p494 = pneg %p176
        %p495 = pneg %p200
        %p496 = pneg %p197
        %p497 = pneg %p221
        %p498 = pneg %p218
        %p499 = pneg %p242
        %p500 = pneg %p239
        %p501 = pneg %p263
        %p502 = pneg %p260
        %p503 = pneg %p284
        %p504 = pneg %p281
        %p505 = pneg %p305
        %p506 = pneg %p302
        %p507 = pneg %p331
        %p508 = pneg %p328
        %s509 = sand.u32 %s318, 1
        %s510 = scalar_lea.sflag [#allocation4], %s509
        %s511 = sand.u32 %s318, 1
        %s512 = smul.addr %s511, 4
        %s513 = scalar_lea.vmem [#allocation11], %s512
        %v515 = vld [vmem:[%s455] sm:$0xf]
        %v516 = vunpack.c.l.bf16 %v515
        %517 = vadd.xlane.f32.xlu0 %v516
        %v518 = vpop.xlane.xlu0 %517
        %v519 = vrcp.pop 128.0
        %v520 = vmul.f32 %v518, %v519
        %v521 = vsub.f32 %v516, %v520
        %v522 = vmul.f32 %v521, %v521
        %523 = vadd.xlane.f32.xlu0 %v522
        %v524 = vpop.xlane.xlu0 %523
        %v525 = vmul.f32 %v524, %v519
        %v526 = vadd.f32 %v525, 1e-05
        %v527 = vrsqrt.pop %v526
        %v528 = vmul.f32 %v521, %v527
        %v529 = vld [vmem:[%s1] sm:$0x1]
        %v531 = vlaneseq
        %v532 = vshrl.u32 %v531, 7
        %v533 = vsub.s32 0, %v532
        %v534 = vrot.slane %v529, %v533
        %v536 = vmul.f32 %v528, %v534
        %v537 = vld [vmem:[%s2] sm:$0x1]
        %v539 = vlaneseq
        %v540 = vshrl.u32 %v539, 7
        %v541 = vsub.s32 0, %v540
        %v542 = vrot.slane %v537, %v541
        %v544 = vadd.f32 %v536, %v542
        %v545 = vpack.c.bf16 %v544, %v544
        %v546 = vld [vmem:[#allocation5] sm:$0xff]
        %v547 = vld [vmem:[#allocation5 + $0x8] sm:$0xf]
        %v548 = vld [vmem:[#allocation5 + $0xc] sm:$0xff]
        %v549 = vld [vmem:[#allocation5 + $0x14] sm:$0xf]
        %v550 = vld [vmem:[#allocation5 + $0x18] sm:$0xff]
        %v551 = vld [vmem:[#allocation5 + $0x20] sm:$0xf]
        %v552 = vld [vmem:[#allocation5 + $0x24] sm:$0xff]
        %v553 = vld [vmem:[#allocation5 + $0x2c] sm:$0xf]
        %v554 = vld [vmem:[#allocation5 + $0x30] sm:$0xff]
        %v555 = vld [vmem:[#allocation5 + $0x38] sm:$0xf]
        %v556 = vld [vmem:[#allocation5 + $0x3c] sm:$0xff]
        %v557 = vld [vmem:[#allocation5 + $0x44] sm:$0xf]
        %v558 = vld [vmem:[#allocation5 + $0x48] sm:$0xff]
        %v559 = vld [vmem:[#allocation5 + $0x50] sm:$0xf]
        %v560 = vld [vmem:[#allocation5 + $0x54] sm:$0xff]
        %v561 = vld [vmem:[#allocation5 + $0x5c] sm:$0xf]
        %v562 = vld [vmem:[#allocation5 + $0x60] sm:$0xff]
        %v563 = vld [vmem:[#allocation5 + $0x68] sm:$0xf]
        %v564 = vld [vmem:[#allocation5 + $0x6c] sm:$0xff]
        %v565 = vld [vmem:[#allocation5 + $0x74] sm:$0xf]
        %v566 = vld [vmem:[#allocation5 + $0x78] sm:$0xff]
        %v567 = vld [vmem:[#allocation5 + $0x80] sm:$0xf]
        %v568 = vld [vmem:[#allocation5 + $0x84] sm:$0xff]
        %v569 = vld [vmem:[#allocation5 + $0x8c] sm:$0xf]
        %v570 = vld [vmem:[#allocation5 + $0x90] sm:$0xff]
        %v571 = vld [vmem:[#allocation5 + $0x98] sm:$0xf]
        %v572 = vld [vmem:[#allocation5 + $0x9c] sm:$0xff]
        %v573 = vld [vmem:[#allocation5 + $0xa4] sm:$0xf]
        %v574 = vld [vmem:[#allocation5 + $0xa8] sm:$0xff]
        %v575 = vld [vmem:[#allocation5 + $0xb0] sm:$0xf]
        %v576 = vld [vmem:[#allocation5 + $0xb4] sm:$0xff]
        %v577 = vld [vmem:[#allocation5 + $0xbc] sm:$0xf]
        %v578 = vld [vmem:[%s4] sm:$0x7]
        %v580 = vlaneseq
        %v581 = vshrl.u32 %v580, 7
        %v582 = vsub.s32 0, %v581
        %v583 = vrot.slane %v578, %v582
        %v584 = vlaneseq
        %v585 = vshrl.u32 %v584, 7
        %v586 = vsub.s32 1, %v585
        %v587 = vrot.slane %v578, %v586
        %v588 = vlaneseq
        %v589 = vshrl.u32 %v588, 7
        %v590 = vsub.s32 2, %v589
        %v591 = vrot.slane %v578, %v590
        %v627 = vunpack.c.l.b16 %v546
        %v628 = vunpack.c.h.b16 %v546
        %v629 = vunpack.c.l.b16 %v547
        %v630 = vunpack.c.l.b16 %v548
        %v631 = vunpack.c.h.b16 %v548
        %v632 = vunpack.c.l.b16 %v549
        %v633 = vunpack.c.l.b16 %v550
        %v634 = vunpack.c.h.b16 %v550
        %v635 = vunpack.c.l.b16 %v551
        %v636 = vunpack.c.l.b16 %v552
        %v637 = vunpack.c.h.b16 %v552
        %v638 = vunpack.c.l.b16 %v553
        %v639 = vunpack.c.l.b16 %v554
        %v640 = vunpack.c.h.b16 %v554
        %v641 = vunpack.c.l.b16 %v555
        %v642 = vunpack.c.l.b16 %v556
        %v643 = vunpack.c.h.b16 %v556
        %v644 = vunpack.c.l.b16 %v557
        %v645 = vunpack.c.l.b16 %v558
        %v646 = vunpack.c.h.b16 %v558
        %v647 = vunpack.c.l.b16 %v559
        %v648 = vunpack.c.l.b16 %v560
        %v649 = vunpack.c.h.b16 %v560
        %v650 = vunpack.c.l.b16 %v561
        %v651 = vunpack.c.l.b16 %v562
        %v652 = vunpack.c.h.b16 %v562
        %v653 = vunpack.c.l.b16 %v563
        %v654 = vunpack.c.l.b16 %v564
        %v655 = vunpack.c.h.b16 %v564
        %v656 = vunpack.c.l.b16 %v565
        %v657 = vunpack.c.l.b16 %v566
        %v658 = vunpack.c.h.b16 %v566
        %v659 = vunpack.c.l.b16 %v567
        %v660 = vunpack.c.l.b16 %v568
        %v661 = vunpack.c.h.b16 %v568
        %v662 = vunpack.c.l.b16 %v569
        %v663 = vunpack.c.l.b16 %v570
        %v664 = vunpack.c.h.b16 %v570
        %v665 = vunpack.c.l.b16 %v571
        %v666 = vunpack.c.l.b16 %v572
        %v667 = vunpack.c.h.b16 %v572
        %v668 = vunpack.c.l.b16 %v573
        %v669 = vunpack.c.l.b16 %v574
        %v670 = vunpack.c.h.b16 %v574
        %v671 = vunpack.c.l.b16 %v575
        %v672 = vunpack.c.l.b16 %v576
        %v673 = vunpack.c.h.b16 %v576
        %v674 = vunpack.c.l.b16 %v577
        %v675 = vpack.c.b16 %v630, %v627
        %v676 = vpack.c.b16 %v631, %v628
        %v677 = vpack.c.b16 %v632, %v629
        %v678 = vpack.c.b16 %v636, %v633
        %v679 = vpack.c.b16 %v637, %v634
        %v680 = vpack.c.b16 %v638, %v635
        %v681 = vpack.c.b16 %v642, %v639
        %v682 = vpack.c.b16 %v643, %v640
        %v683 = vpack.c.b16 %v644, %v641
        %v684 = vpack.c.b16 %v648, %v645
        %v685 = vpack.c.b16 %v649, %v646
        %v686 = vpack.c.b16 %v650, %v647
        %v687 = vpack.c.b16 %v654, %v651
        %v688 = vpack.c.b16 %v655, %v652
        %v689 = vpack.c.b16 %v656, %v653
        %v690 = vpack.c.b16 %v660, %v657
        %v691 = vpack.c.b16 %v661, %v658
        %v692 = vpack.c.b16 %v662, %v659
        %v693 = vpack.c.b16 %v666, %v663
        %v694 = vpack.c.b16 %v667, %v664
        %v695 = vpack.c.b16 %v668, %v665
        %v696 = vpack.c.b16 %v672, %v669
        %v697 = vpack.c.b16 %v673, %v670
        %v698 = vpack.c.b16 %v674, %v671
        %723 = vmatprep.subr.bf16.mxu0 %v697
        %724 = vmatpush1.bf16.msra.mxu0 %v696
        %725 = vmatprep.subr.bf16.mxu0 %v694
        %726 = vmatpush1.bf16.msra.mxu0 %v693
        %727 = vmatprep.subr.bf16.mxu0 %v691
        %728 = vmatpush1.bf16.msra.mxu0 %v690
        %729 = vmatprep.subr.bf16.mxu0 %v688
        %730 = vmatpush1.bf16.msra.mxu0 %v687
        %731 = vmatprep.subr.bf16.mxu0 %v685
        %732 = vmatpush1.bf16.msra.mxu0 %v684
        %733 = vmatprep.subr.bf16.mxu0 %v682
        %734 = vmatpush1.bf16.msra.mxu0 %v681
        %735 = vmatprep.subr.bf16.mxu0 %v679
        %736 = vmatpush1.bf16.msra.mxu0 %v678
        %737 = vmatprep.subr.bf16.mxu0 %v676
        %738 = vmatpush1.bf16.msra.mxu0 %v675
        %739 = vmatprep.subr.bf16.mxu0 0
        %740 = vmatpush2.bf16.msra.mxu0 0
        %741 = vmatprep.subr.bf16.mxu0 0
        %742 = vmatpush2.bf16.msra.mxu0 0
        %743 = vmatprep.subr.bf16.mxu0 0
        %744 = vmatpush2.bf16.msra.mxu0 0
        %745 = vmatprep.subr.bf16.mxu0 0
        %746 = vmatpush2.bf16.msra.mxu0 0
        %747 = vmatprep.subr.bf16.mxu0 0
        %748 = vmatpush2.bf16.msra.mxu0 0
        %749 = vmatprep.subr.bf16.mxu0 0
        %750 = vmatpush2.bf16.msra.mxu0 0
        %751 = vmatprep.subr.bf16.mxu0 0
        %752 = vmatpush2.bf16.msra.mxu0 0
        %753 = vmatprep.subr.bf16.mxu0 0
        %754 = vmatpush2.bf16.msra.mxu0 0
        %755 = vmatprep.mubr.bf16.mxu0 0
        %756 = vmatmul.mubr.bf16.gmra.mxu0 %v545
        %v757 = vpop.f32.mrf.mxu0
        %v758 = vadd.f32 %v583, %v757
        %v759 = vpop.f32.mrf.mxu0
        %v760 = vadd.f32 %v587, %v759
        %v761 = vpop.f32.mrf.mxu0
        %v762 = vpop.f32.mrf.mxu0
        %763 = vdwg.mxu0
        %764 = vmatprep.subr.bf16.mxu0 0
        %765 = vmatpush1.bf16.msra.mxu0 %v698
        %766 = vmatprep.subr.bf16.mxu0 0
        %767 = vmatpush1.bf16.msra.mxu0 %v695
        %768 = vmatprep.subr.bf16.mxu0 0
        %769 = vmatpush1.bf16.msra.mxu0 %v692
        %770 = vmatprep.subr.bf16.mxu0 0
        %771 = vmatpush1.bf16.msra.mxu0 %v689
        %772 = vmatprep.subr.bf16.mxu0 0
        %773 = vmatpush1.bf16.msra.mxu0 %v686
        %774 = vmatprep.subr.bf16.mxu0 0
        %775 = vmatpush1.bf16.msra.mxu0 %v683
        %776 = vmatprep.subr.bf16.mxu0 0
        %777 = vmatpush1.bf16.msra.mxu0 %v680
        %778 = vmatprep.subr.bf16.mxu0 0
        %779 = vmatpush1.bf16.msra.mxu0 %v677
        %780 = vmatprep.subr.bf16.mxu0 0
        %781 = vmatpush2.bf16.msra.mxu0 0
        %782 = vmatprep.subr.bf16.mxu0 0
        %783 = vmatpush2.bf16.msra.mxu0 0
        %784 = vmatprep.subr.bf16.mxu0 0
        %785 = vmatpush2.bf16.msra.mxu0 0
        %786 = vmatprep.subr.bf16.mxu0 0
        %787 = vmatpush2.bf16.msra.mxu0 0
        %788 = vmatprep.subr.bf16.mxu0 0
        %789 = vmatpush2.bf16.msra.mxu0 0
        %790 = vmatprep.subr.bf16.mxu0 0
        %791 = vmatpush2.bf16.msra.mxu0 0
        %792 = vmatprep.subr.bf16.mxu0 0
        %793 = vmatpush2.bf16.msra.mxu0 0
        %794 = vmatprep.subr.bf16.mxu0 0
        %795 = vmatpush2.bf16.msra.mxu0 0
        %796 = vmatprep.mubr.bf16.mxu0 0
        %797 = vmatmul.mubr.bf16.gmra.mxu0 %v545
        %v798 = vpop.f32.mrf.mxu0
        %v799 = vadd.f32 %v591, %v798
        %v800 = vpop.f32.mrf.mxu0
        %v801 = vpop.f32.mrf.mxu0
        %v802 = vpop.f32.mrf.mxu0
        %803 = vdwg.mxu0
        %v804 = vpack.c.bf16 %v758, %v758
        %v805 = vpack.c.bf16 %v760, %v760
        %v806 = vpack.c.bf16 %v799, %v799
        %v807 = vld [vmem:[#allocation7] sm:$0xf]
        %v808 = vld [vmem:[#allocation7 + $0x4] sm:$0xf]
        %v809 = vld [vmem:[#allocation7 + $0x8] sm:$0xf]
        %v810 = vld [vmem:[#allocation7 + $0xc] sm:$0xf]
        %v811 = vld [vmem:[#allocation7 + $0x10] sm:$0xf]
        %v812 = vld [vmem:[#allocation7 + $0x14] sm:$0xf]
        %v813 = vld [vmem:[#allocation7 + $0x18] sm:$0xf]
        %v814 = vld [vmem:[#allocation7 + $0x1c] sm:$0xf]
        %v815 = vld [vmem:[#allocation7 + $0x20] sm:$0xf]
        %v816 = vld [vmem:[#allocation7 + $0x24] sm:$0xf]
        %v817 = vld [vmem:[#allocation7 + $0x28] sm:$0xf]
        %v818 = vld [vmem:[#allocation7 + $0x2c] sm:$0xf]
        %v819 = vld [vmem:[#allocation7 + $0x30] sm:$0xf]
        %v820 = vld [vmem:[#allocation7 + $0x34] sm:$0xf]
        %v821 = vld [vmem:[#allocation7 + $0x38] sm:$0xf]
        %v822 = vld [vmem:[#allocation7 + $0x3c] sm:$0xf]
        %vm823 = vcmask 261120
        %v825 = vsel %vm823, %v804, 0
        %v828 = vsel %vm823, %v805, 0
        %830 = vmatprep.subr.bf16.mxu0 0
        %831 = vmatpush1.bf16.xpose.msra.mxu0 0
        %832 = vmatprep.subr.bf16.mxu0 0
        %833 = vmatpush1.bf16.xpose.msra.mxu0 0
        %834 = vmatprep.subr.bf16.mxu0 0
        %835 = vmatpush1.bf16.xpose.msra.mxu0 0
        %836 = vmatprep.subr.bf16.mxu0 0
        %837 = vmatpush1.bf16.xpose.msra.mxu0 0
        %838 = vmatprep.subr.bf16.mxu0 0
        %839 = vmatpush1.bf16.xpose.msra.mxu0 0
        %840 = vmatprep.subr.bf16.mxu0 0
        %841 = vmatpush1.bf16.xpose.msra.mxu0 0
        %842 = vmatprep.subr.bf16.mxu0 0
        %843 = vmatpush1.bf16.xpose.msra.mxu0 0
        %844 = vmatprep.subr.bf16.mxu0 0
        %845 = vmatpush1.bf16.xpose.msra.mxu0 %v828
        %846 = vmatprep.subr.bf16.mxu0 0
        %847 = vmatpush2.bf16.xpose.msra.mxu0 0
        %848 = vmatprep.subr.bf16.mxu0 0
        %849 = vmatpush2.bf16.xpose.msra.mxu0 0
        %850 = vmatprep.subr.bf16.mxu0 0
        %851 = vmatpush2.bf16.xpose.msra.mxu0 0
        %852 = vmatprep.subr.bf16.mxu0 0
        %853 = vmatpush2.bf16.xpose.msra.mxu0 0
        %854 = vmatprep.subr.bf16.mxu0 0
        %855 = vmatpush2.bf16.xpose.msra.mxu0 0
        %856 = vmatprep.subr.bf16.mxu0 0
        %857 = vmatpush2.bf16.xpose.msra.mxu0 0
        %858 = vmatprep.subr.bf16.mxu0 0
        %859 = vmatpush2.bf16.xpose.msra.mxu0 0
        %860 = vmatprep.subr.bf16.mxu0 0
        %861 = vmatpush2.bf16.xpose.msra.mxu0 0
        %862 = vmatprep.mubr.bf16.mxu0 0
        %863 = vmatmul.mubr.bf16.gmra.mxu0 %v825
        %v864 = vpop.f32.mrf.mxu0
        %v865 = vadd.f32 0.0, %v864
        %v866 = vpop.f32.mrf.mxu0
        %v867 = vpop.f32.mrf.mxu0
        %v868 = vpop.f32.mrf.mxu0
        %869 = vdwg.mxu0
        %vm870 = vcmask 64512
        %v871 = vsel %vm870, %v865, -inf
        %872 = vmax.xlane.f32.xlu0 %v871
        %v873 = vpop.xlane.xlu0 %872
        %v874 = vsub.f32 %v865, %v873
        %v875 = vmul.f32 %v874, 1.442695
        %v876 = vpow.pop %v875
        %v877 = vsel %vm870, %v876, 0.0
        %878 = vadd.xlane.f32.xlu0 %v877
        %v879 = vpop.xlane.xlu0 %878
        %v880 = vrcp.pop %v879
        %v881 = vpack.c.bf16 %v876, %v876
        %v883 = vsel %vm870, %v881, 0
        %vm885 = vcmask 1043456
        %v887 = vsel %vm885, %v806, 0
        %889 = vmatprep.subr.bf16.mxu0 0
        %890 = vmatpush1.bf16.msra.mxu0 0
        %891 = vmatprep.subr.bf16.mxu0 0
        %892 = vmatpush1.bf16.msra.mxu0 0
        %893 = vmatprep.subr.bf16.mxu0 0
        %894 = vmatpush1.bf16.msra.mxu0 0
        %895 = vmatprep.subr.bf16.mxu0 0
        %896 = vmatpush1.bf16.msra.mxu0 0
        %897 = vmatprep.subr.bf16.mxu0 0
        %898 = vmatpush1.bf16.msra.mxu0 0
        %899 = vmatprep.subr.bf16.mxu0 0
        %900 = vmatpush1.bf16.msra.mxu0 0
        %901 = vmatprep.subr.bf16.mxu0 0
        %902 = vmatpush1.bf16.msra.mxu0 0
        %903 = vmatprep.subr.bf16.mxu0 0
        %904 = vmatpush1.bf16.msra.mxu0 %v887
        %905 = vmatprep.subr.bf16.mxu0 0
        %906 = vmatpush2.bf16.msra.mxu0 0
        %907 = vmatprep.subr.bf16.mxu0 0
        %908 = vmatpush2.bf16.msra.mxu0 0
        %909 = vmatprep.subr.bf16.mxu0 0
        %910 = vmatpush2.bf16.msra.mxu0 0
        %911 = vmatprep.subr.bf16.mxu0 0
        %912 = vmatpush2.bf16.msra.mxu0 0
        %913 = vmatprep.subr.bf16.mxu0 0
        %914 = vmatpush2.bf16.msra.mxu0 0
        %915 = vmatprep.subr.bf16.mxu0 0
        %916 = vmatpush2.bf16.msra.mxu0 0
        %917 = vmatprep.subr.bf16.mxu0 0
        %918 = vmatpush2.bf16.msra.mxu0 0
        %919 = vmatprep.subr.bf16.mxu0 0
        %920 = vmatpush2.bf16.msra.mxu0 0
        %921 = vmatprep.mubr.bf16.mxu0 0
        %922 = vmatmul.mubr.bf16.gmra.mxu0 %v883
        %v923 = vpop.f32.mrf.mxu0
        %v924 = vadd.f32 0.0, %v923
        %v925 = vpop.f32.mrf.mxu0
        %v926 = vpop.f32.mrf.mxu0
        %v927 = vpop.f32.mrf.mxu0
        %928 = vdwg.mxu0
        %v929 = vmul.f32 %v924, %v880
        %v930 = vpack.c.bf16 %v929, %v929
        %932 = vrot.lane.b32.xlu0 %v804, 96
        %v933 = vpop.permute.xlu0 %932
        %935 = vrot.lane.b32.xlu0 %v805, 96
        %v936 = vpop.permute.xlu0 %935
        %v938 = vsel %vm823, %v933, 0
        %v941 = vsel %vm823, %v936, 0
        %943 = vmatprep.subr.bf16.mxu0 0
        %944 = vmatpush1.bf16.xpose.msra.mxu0 0
        %945 = vmatprep.subr.bf16.mxu0 0
        %946 = vmatpush1.bf16.xpose.msra.mxu0 0
        %947 = vmatprep.subr.bf16.mxu0 0
        %948 = vmatpush1.bf16.xpose.msra.mxu0 0
        %949 = vmatprep.subr.bf16.mxu0 0
        %950 = vmatpush1.bf16.xpose.msra.mxu0 0
        %951 = vmatprep.subr.bf16.mxu0 0
        %952 = vmatpush1.bf16.xpose.msra.mxu0 0
        %953 = vmatprep.subr.bf16.mxu0 0
        %954 = vmatpush1.bf16.xpose.msra.mxu0 0
        %955 = vmatprep.subr.bf16.mxu0 0
        %956 = vmatpush1.bf16.xpose.msra.mxu0 0
        %957 = vmatprep.subr.bf16.mxu0 0
        %958 = vmatpush1.bf16.xpose.msra.mxu0 %v941
        %959 = vmatprep.subr.bf16.mxu0 0
        %960 = vmatpush2.bf16.xpose.msra.mxu0 0
        %961 = vmatprep.subr.bf16.mxu0 0
        %962 = vmatpush2.bf16.xpose.msra.mxu0 0
        %963 = vmatprep.subr.bf16.mxu0 0
        %964 = vmatpush2.bf16.xpose.msra.mxu0 0
        %965 = vmatprep.subr.bf16.mxu0 0
        %966 = vmatpush2.bf16.xpose.msra.mxu0 0
        %967 = vmatprep.subr.bf16.mxu0 0
        %968 = vmatpush2.bf16.xpose.msra.mxu0 0
        %969 = vmatprep.subr.bf16.mxu0 0
        %970 = vmatpush2.bf16.xpose.msra.mxu0 0
        %971 = vmatprep.subr.bf16.mxu0 0
        %972 = vmatpush2.bf16.xpose.msra.mxu0 0
        %973 = vmatprep.subr.bf16.mxu0 0
        %974 = vmatpush2.bf16.xpose.msra.mxu0 0
        %975 = vmatprep.mubr.bf16.mxu0 0
        %976 = vmatmul.mubr.bf16.gmra.mxu0 %v938
        %v977 = vpop.f32.mrf.mxu0
        %v978 = vadd.f32 0.0, %v977
        %v979 = vpop.f32.mrf.mxu0
        %v980 = vpop.f32.mrf.mxu0
        %v981 = vpop.f32.mrf.mxu0
        %982 = vdwg.mxu0
        %v983 = vsel %vm870, %v978, -inf
        %984 = vmax.xlane.f32.xlu0 %v983
        %v985 = vpop.xlane.xlu0 %984
        %v986 = vsub.f32 %v978, %v985
        %v987 = vmul.f32 %v986, 1.442695
        %v988 = vpow.pop %v987
        %v989 = vsel %vm870, %v988, 0.0
        %990 = vadd.xlane.f32.xlu0 %v989
        %v991 = vpop.xlane.xlu0 %990
        %v992 = vrcp.pop %v991
        %v993 = vpack.c.bf16 %v988, %v988
        %995 = vrot.lane.b32.xlu0 %v806, 96
        %v996 = vpop.permute.xlu0 %995
        %v998 = vsel %vm870, %v993, 0
        %v1001 = vsel %vm885, %v996, 0
        %1003 = vmatprep.subr.bf16.mxu0 0
        %1004 = vmatpush1.bf16.msra.mxu0 0
        %1005 = vmatprep.subr.bf16.mxu0 0
        %1006 = vmatpush1.bf16.msra.mxu0 0
        %1007 = vmatprep.subr.bf16.mxu0 0
        %1008 = vmatpush1.bf16.msra.mxu0 0
        %1009 = vmatprep.subr.bf16.mxu0 0
        %1010 = vmatpush1.bf16.msra.mxu0 0
        %1011 = vmatprep.subr.bf16.mxu0 0
        %1012 = vmatpush1.bf16.msra.mxu0 0
        %1013 = vmatprep.subr.bf16.mxu0 0
        %1014 = vmatpush1.bf16.msra.mxu0 0
        %1015 = vmatprep.subr.bf16.mxu0 0
        %1016 = vmatpush1.bf16.msra.mxu0 0
        %1017 = vmatprep.subr.bf16.mxu0 0
        %1018 = vmatpush1.bf16.msra.mxu0 %v1001
        %1019 = vmatprep.subr.bf16.mxu0 0
        %1020 = vmatpush2.bf16.msra.mxu0 0
        %1021 = vmatprep.subr.bf16.mxu0 0
        %1022 = vmatpush2.bf16.msra.mxu0 0
        %1023 = vmatprep.subr.bf16.mxu0 0
        %1024 = vmatpush2.bf16.msra.mxu0 0
        %1025 = vmatprep.subr.bf16.mxu0 0
        %1026 = vmatpush2.bf16.msra.mxu0 0
        %1027 = vmatprep.subr.bf16.mxu0 0
        %1028 = vmatpush2.bf16.msra.mxu0 0
        %1029 = vmatprep.subr.bf16.mxu0 0
        %1030 = vmatpush2.bf16.msra.mxu0 0
        %1031 = vmatprep.subr.bf16.mxu0 0
        %1032 = vmatpush2.bf16.msra.mxu0 0
        %1033 = vmatprep.subr.bf16.mxu0 0
        %1034 = vmatpush2.bf16.msra.mxu0 0
        %1035 = vmatprep.mubr.bf16.mxu0 0
        %1036 = vmatmul.mubr.bf16.gmra.mxu0 %v998
        %v1037 = vpop.f32.mrf.mxu0
        %v1038 = vadd.f32 0.0, %v1037
        %v1039 = vpop.f32.mrf.mxu0
        %v1040 = vpop.f32.mrf.mxu0
        %v1041 = vpop.f32.mrf.mxu0
        %1042 = vdwg.mxu0
        %v1043 = vmul.f32 %v1038, %v992
        %v1044 = vpack.c.bf16 %v1043, %v1043
        %v1049 = vunpack.c.l.b16 %v811
        %v1050 = vunpack.c.l.b16 %v812
        %v1051 = vunpack.c.l.b16 %v813
        %v1052 = vunpack.c.l.b16 %v814
        %v1053 = vpack.c.b16 %v1050, %v1049
        %v1054 = vpack.c.b16 %v1052, %v1051
        %v1058 = vsel %vm823, %v1044, 0
        %1060 = vmatprep.subr.bf16.mxu0 0
        %1061 = vmatpush1.bf16.msra.mxu0 0
        %1062 = vmatprep.subr.bf16.mxu0 0
        %1063 = vmatpush1.bf16.msra.mxu0 0
        %1064 = vmatprep.subr.bf16.mxu0 0
        %1065 = vmatpush1.bf16.msra.mxu0 0
        %1066 = vmatprep.subr.bf16.mxu0 0
        %1067 = vmatpush1.bf16.msra.mxu0 0
        %1068 = vmatprep.subr.bf16.mxu0 0
        %1069 = vmatpush1.bf16.msra.mxu0 0
        %1070 = vmatprep.subr.bf16.mxu0 0
        %1071 = vmatpush1.bf16.msra.mxu0 0
        %1072 = vmatprep.subr.bf16.mxu0 0
        %1073 = vmatpush1.bf16.msra.mxu0 %v1054
        %1074 = vmatprep.subr.bf16.mxu0 0
        %1075 = vmatpush1.bf16.msra.mxu0 %v1053
        %1076 = vmatprep.subr.bf16.mxu0 0
        %1077 = vmatpush2.bf16.msra.mxu0 0
        %1078 = vmatprep.subr.bf16.mxu0 0
        %1079 = vmatpush2.bf16.msra.mxu0 0
        %1080 = vmatprep.subr.bf16.mxu0 0
        %1081 = vmatpush2.bf16.msra.mxu0 0
        %1082 = vmatprep.subr.bf16.mxu0 0
        %1083 = vmatpush2.bf16.msra.mxu0 0
        %1084 = vmatprep.subr.bf16.mxu0 0
        %1085 = vmatpush2.bf16.msra.mxu0 0
        %1086 = vmatprep.subr.bf16.mxu0 0
        %1087 = vmatpush2.bf16.msra.mxu0 0
        %1088 = vmatprep.subr.bf16.mxu0 0
        %1089 = vmatpush2.bf16.msra.mxu0 0
        %1090 = vmatprep.subr.bf16.mxu0 0
        %1091 = vmatpush2.bf16.msra.mxu0 0
        %1092 = vmatprep.mubr.bf16.mxu0 0
        %1093 = vmatmul.mubr.bf16.gmra.mxu0 %v1058
        %v1094 = vpop.f32.mrf.mxu0
        %v1095 = vadd.f32 0.0, %v1094
        %v1096 = vpop.f32.mrf.mxu0
        %v1097 = vpop.f32.mrf.mxu0
        %v1098 = vpop.f32.mrf.mxu0
        %1099 = vdwg.mxu0
        %v1104 = vunpack.c.l.b16 %v807
        %v1105 = vunpack.c.l.b16 %v808
        %v1106 = vunpack.c.l.b16 %v809
        %v1107 = vunpack.c.l.b16 %v810
        %v1108 = vpack.c.b16 %v1105, %v1104
        %v1109 = vpack.c.b16 %v1107, %v1106
        %v1113 = vsel %vm823, %v930, 0
        %1115 = vmatprep.subr.bf16.mxu0 0
        %1116 = vmatpush1.bf16.msra.mxu0 0
        %1117 = vmatprep.subr.bf16.mxu0 0
        %1118 = vmatpush1.bf16.msra.mxu0 0
        %1119 = vmatprep.subr.bf16.mxu0 0
        %1120 = vmatpush1.bf16.msra.mxu0 0
        %1121 = vmatprep.subr.bf16.mxu0 0
        %1122 = vmatpush1.bf16.msra.mxu0 0
        %1123 = vmatprep.subr.bf16.mxu0 0
        %1124 = vmatpush1.bf16.msra.mxu0 0
        %1125 = vmatprep.subr.bf16.mxu0 0
        %1126 = vmatpush1.bf16.msra.mxu0 0
        %1127 = vmatprep.subr.bf16.mxu0 0
        %1128 = vmatpush1.bf16.msra.mxu0 %v1109
        %1129 = vmatprep.subr.bf16.mxu0 0
        %1130 = vmatpush1.bf16.msra.mxu0 %v1108
        %1131 = vmatprep.subr.bf16.mxu0 0
        %1132 = vmatpush2.bf16.msra.mxu0 0
        %1133 = vmatprep.subr.bf16.mxu0 0
        %1134 = vmatpush2.bf16.msra.mxu0 0
        %1135 = vmatprep.subr.bf16.mxu0 0
        %1136 = vmatpush2.bf16.msra.mxu0 0
        %1137 = vmatprep.subr.bf16.mxu0 0
        %1138 = vmatpush2.bf16.msra.mxu0 0
        %1139 = vmatprep.subr.bf16.mxu0 0
        %1140 = vmatpush2.bf16.msra.mxu0 0
        %1141 = vmatprep.subr.bf16.mxu0 0
        %1142 = vmatpush2.bf16.msra.mxu0 0
        %1143 = vmatprep.subr.bf16.mxu0 0
        %1144 = vmatpush2.bf16.msra.mxu0 0
        %1145 = vmatprep.subr.bf16.mxu0 0
        %1146 = vmatpush2.bf16.msra.mxu0 0
        %1147 = vmatprep.mubr.bf16.mxu0 0
        %1148 = vmatmul.mubr.bf16.gmra.mxu0 %v1113
        %v1149 = vpop.f32.mrf.mxu0
        %v1150 = vadd.f32 %v1095, %v1149
        %v1151 = vpop.f32.mrf.mxu0
        %v1152 = vpop.f32.mrf.mxu0
        %v1153 = vpop.f32.mrf.mxu0
        %1154 = vdwg.mxu0
        %1155 = vrot.lane.b32.xlu0 %v804, 64
        %v1156 = vpop.permute.xlu0 %1155
        %1157 = vrot.lane.b32.xlu0 %v805, 64
        %v1158 = vpop.permute.xlu0 %1157
        %v1160 = vsel %vm823, %v1156, 0
        %v1163 = vsel %vm823, %v1158, 0
        %1165 = vmatprep.subr.bf16.mxu0 0
        %1166 = vmatpush1.bf16.xpose.msra.mxu0 0
        %1167 = vmatprep.subr.bf16.mxu0 0
        %1168 = vmatpush1.bf16.xpose.msra.mxu0 0
        %1169 = vmatprep.subr.bf16.mxu0 0
        %1170 = vmatpush1.bf16.xpose.msra.mxu0 0
        %1171 = vmatprep.subr.bf16.mxu0 0
        %1172 = vmatpush1.bf16.xpose.msra.mxu0 0
        %1173 = vmatprep.subr.bf16.mxu0 0
        %1174 = vmatpush1.bf16.xpose.msra.mxu0 0
        %1175 = vmatprep.subr.bf16.mxu0 0
        %1176 = vmatpush1.bf16.xpose.msra.mxu0 0
        %1177 = vmatprep.subr.bf16.mxu0 0
        %1178 = vmatpush1.bf16.xpose.msra.mxu0 0
        %1179 = vmatprep.subr.bf16.mxu0 0
        %1180 = vmatpush1.bf16.xpose.msra.mxu0 %v1163
        %1181 = vmatprep.subr.bf16.mxu0 0
        %1182 = vmatpush2.bf16.xpose.msra.mxu0 0
        %1183 = vmatprep.subr.bf16.mxu0 0
        %1184 = vmatpush2.bf16.xpose.msra.mxu0 0
        %1185 = vmatprep.subr.bf16.mxu0 0
        %1186 = vmatpush2.bf16.xpose.msra.mxu0 0
        %1187 = vmatprep.subr.bf16.mxu0 0
        %1188 = vmatpush2.bf16.xpose.msra.mxu0 0
        %1189 = vmatprep.subr.bf16.mxu0 0
        %1190 = vmatpush2.bf16.xpose.msra.mxu0 0
        %1191 = vmatprep.subr.bf16.mxu0 0
        %1192 = vmatpush2.bf16.xpose.msra.mxu0 0
        %1193 = vmatprep.subr.bf16.mxu0 0
        %1194 = vmatpush2.bf16.xpose.msra.mxu0 0
        %1195 = vmatprep.subr.bf16.mxu0 0
        %1196 = vmatpush2.bf16.xpose.msra.mxu0 0
        %1197 = vmatprep.mubr.bf16.mxu0 0
        %1198 = vmatmul.mubr.bf16.gmra.mxu0 %v1160
        %v1199 = vpop.f32.mrf.mxu0
        %v1200 = vadd.f32 0.0, %v1199
        %v1201 = vpop.f32.mrf.mxu0
        %v1202 = vpop.f32.mrf.mxu0
        %v1203 = vpop.f32.mrf.mxu0
        %1204 = vdwg.mxu0
        %v1205 = vsel %vm870, %v1200, -inf
        %1206 = vmax.xlane.f32.xlu0 %v1205
        %v1207 = vpop.xlane.xlu0 %1206
        %v1208 = vsub.f32 %v1200, %v1207
        %v1209 = vmul.f32 %v1208, 1.442695
        %v1210 = vpow.pop %v1209
        %v1211 = vsel %vm870, %v1210, 0.0
        %1212 = vadd.xlane.f32.xlu0 %v1211
        %v1213 = vpop.xlane.xlu0 %1212
        %v1214 = vrcp.pop %v1213
        %v1215 = vpack.c.bf16 %v1210, %v1210
        %1216 = vrot.lane.b32.xlu0 %v806, 64
        %v1217 = vpop.permute.xlu0 %1216
        %v1219 = vsel %vm870, %v1215, 0
        %v1222 = vsel %vm885, %v1217, 0
        %1224 = vmatprep.subr.bf16.mxu0 0
        %1225 = vmatpush1.bf16.msra.mxu0 0
        %1226 = vmatprep.subr.bf16.mxu0 0
        %1227 = vmatpush1.bf16.msra.mxu0 0
        %1228 = vmatprep.subr.bf16.mxu0 0
        %1229 = vmatpush1.bf16.msra.mxu0 0
        %1230 = vmatprep.subr.bf16.mxu0 0
        %1231 = vmatpush1.bf16.msra.mxu0 0
        %1232 = vmatprep.subr.bf16.mxu0 0
        %1233 = vmatpush1.bf16.msra.mxu0 0
        %1234 = vmatprep.subr.bf16.mxu0 0
        %1235 = vmatpush1.bf16.msra.mxu0 0
        %1236 = vmatprep.subr.bf16.mxu0 0
        %1237 = vmatpush1.bf16.msra.mxu0 0
        %1238 = vmatprep.subr.bf16.mxu0 0
        %1239 = vmatpush1.bf16.msra.mxu0 %v1222
        %1240 = vmatprep.subr.bf16.mxu0 0
        %1241 = vmatpush2.bf16.msra.mxu0 0
        %1242 = vmatprep.subr.bf16.mxu0 0
        %1243 = vmatpush2.bf16.msra.mxu0 0
        %1244 = vmatprep.subr.bf16.mxu0 0
        %1245 = vmatpush2.bf16.msra.mxu0 0
        %1246 = vmatprep.subr.bf16.mxu0 0
        %1247 = vmatpush2.bf16.msra.mxu0 0
        %1248 = vmatprep.subr.bf16.mxu0 0
        %1249 = vmatpush2.bf16.msra.mxu0 0
        %1250 = vmatprep.subr.bf16.mxu0 0
        %1251 = vmatpush2.bf16.msra.mxu0 0
        %1252 = vmatprep.subr.bf16.mxu0 0
        %1253 = vmatpush2.bf16.msra.mxu0 0
        %1254 = vmatprep.subr.bf16.mxu0 0
        %1255 = vmatpush2.bf16.msra.mxu0 0
        %1256 = vmatprep.mubr.bf16.mxu0 0
        %1257 = vmatmul.mubr.bf16.gmra.mxu0 %v1219
        %v1258 = vpop.f32.mrf.mxu0
        %v1259 = vadd.f32 0.0, %v1258
        %v1260 = vpop.f32.mrf.mxu0
        %v1261 = vpop.f32.mrf.mxu0
        %v1262 = vpop.f32.mrf.mxu0
        %1263 = vdwg.mxu0
        %v1264 = vmul.f32 %v1259, %v1214
        %v1265 = vpack.c.bf16 %v1264, %v1264
        %v1270 = vunpack.c.l.b16 %v815
        %v1271 = vunpack.c.l.b16 %v816
        %v1272 = vunpack.c.l.b16 %v817
        %v1273 = vunpack.c.l.b16 %v818
        %v1274 = vpack.c.b16 %v1271, %v1270
        %v1275 = vpack.c.b16 %v1273, %v1272
        %v1279 = vsel %vm823, %v1265, 0
        %1281 = vmatprep.subr.bf16.mxu0 0
        %1282 = vmatpush1.bf16.msra.mxu0 0
        %1283 = vmatprep.subr.bf16.mxu0 0
        %1284 = vmatpush1.bf16.msra.mxu0 0
        %1285 = vmatprep.subr.bf16.mxu0 0
        %1286 = vmatpush1.bf16.msra.mxu0 0
        %1287 = vmatprep.subr.bf16.mxu0 0
        %1288 = vmatpush1.bf16.msra.mxu0 0
        %1289 = vmatprep.subr.bf16.mxu0 0
        %1290 = vmatpush1.bf16.msra.mxu0 0
        %1291 = vmatprep.subr.bf16.mxu0 0
        %1292 = vmatpush1.bf16.msra.mxu0 0
        %1293 = vmatprep.subr.bf16.mxu0 0
        %1294 = vmatpush1.bf16.msra.mxu0 %v1275
        %1295 = vmatprep.subr.bf16.mxu0 0
        %1296 = vmatpush1.bf16.msra.mxu0 %v1274
        %1297 = vmatprep.subr.bf16.mxu0 0
        %1298 = vmatpush2.bf16.msra.mxu0 0
        %1299 = vmatprep.subr.bf16.mxu0 0
        %1300 = vmatpush2.bf16.msra.mxu0 0
        %1301 = vmatprep.subr.bf16.mxu0 0
        %1302 = vmatpush2.bf16.msra.mxu0 0
        %1303 = vmatprep.subr.bf16.mxu0 0
        %1304 = vmatpush2.bf16.msra.mxu0 0
        %1305 = vmatprep.subr.bf16.mxu0 0
        %1306 = vmatpush2.bf16.msra.mxu0 0
        %1307 = vmatprep.subr.bf16.mxu0 0
        %1308 = vmatpush2.bf16.msra.mxu0 0
        %1309 = vmatprep.subr.bf16.mxu0 0
        %1310 = vmatpush2.bf16.msra.mxu0 0
        %1311 = vmatprep.subr.bf16.mxu0 0
        %1312 = vmatpush2.bf16.msra.mxu0 0
        %1313 = vmatprep.mubr.bf16.mxu0 0
        %1314 = vmatmul.mubr.bf16.gmra.mxu0 %v1279
        %v1315 = vpop.f32.mrf.mxu0
        %v1316 = vadd.f32 0.0, %v1315
        %v1317 = vpop.f32.mrf.mxu0
        %v1318 = vpop.f32.mrf.mxu0
        %v1319 = vpop.f32.mrf.mxu0
        %1320 = vdwg.mxu0
        %v1321 = vadd.f32 %v1150, %v1316
        %1322 = vrot.lane.b32.xlu0 %v804, 32
        %v1323 = vpop.permute.xlu0 %1322
        %1324 = vrot.lane.b32.xlu0 %v805, 32
        %v1325 = vpop.permute.xlu0 %1324
        %v1327 = vsel %vm823, %v1323, 0
        %v1330 = vsel %vm823, %v1325, 0
        %1332 = vmatprep.subr.bf16.mxu0 0
        %1333 = vmatpush1.bf16.xpose.msra.mxu0 0
        %1334 = vmatprep.subr.bf16.mxu0 0
        %1335 = vmatpush1.bf16.xpose.msra.mxu0 0
        %1336 = vmatprep.subr.bf16.mxu0 0
        %1337 = vmatpush1.bf16.xpose.msra.mxu0 0
        %1338 = vmatprep.subr.bf16.mxu0 0
        %1339 = vmatpush1.bf16.xpose.msra.mxu0 0
        %1340 = vmatprep.subr.bf16.mxu0 0
        %1341 = vmatpush1.bf16.xpose.msra.mxu0 0
        %1342 = vmatprep.subr.bf16.mxu0 0
        %1343 = vmatpush1.bf16.xpose.msra.mxu0 0
        %1344 = vmatprep.subr.bf16.mxu0 0
        %1345 = vmatpush1.bf16.xpose.msra.mxu0 0
        %1346 = vmatprep.subr.bf16.mxu0 0
        %1347 = vmatpush1.bf16.xpose.msra.mxu0 %v1330
        %1348 = vmatprep.subr.bf16.mxu0 0
        %1349 = vmatpush2.bf16.xpose.msra.mxu0 0
        %1350 = vmatprep.subr.bf16.mxu0 0
        %1351 = vmatpush2.bf16.xpose.msra.mxu0 0
        %1352 = vmatprep.subr.bf16.mxu0 0
        %1353 = vmatpush2.bf16.xpose.msra.mxu0 0
        %1354 = vmatprep.subr.bf16.mxu0 0
        %1355 = vmatpush2.bf16.xpose.msra.mxu0 0
        %1356 = vmatprep.subr.bf16.mxu0 0
        %1357 = vmatpush2.bf16.xpose.msra.mxu0 0
        %1358 = vmatprep.subr.bf16.mxu0 0
        %1359 = vmatpush2.bf16.xpose.msra.mxu0 0
        %1360 = vmatprep.subr.bf16.mxu0 0
        %1361 = vmatpush2.bf16.xpose.msra.mxu0 0
        %1362 = vmatprep.subr.bf16.mxu0 0
        %1363 = vmatpush2.bf16.xpose.msra.mxu0 0
        %1364 = vmatprep.mubr.bf16.mxu0 0
        %1365 = vmatmul.mubr.bf16.gmra.mxu0 %v1327
        %v1366 = vpop.f32.mrf.mxu0
        %v1367 = vadd.f32 0.0, %v1366
        %v1368 = vpop.f32.mrf.mxu0
        %v1369 = vpop.f32.mrf.mxu0
        %v1370 = vpop.f32.mrf.mxu0
        %1371 = vdwg.mxu0
        %v1372 = vsel %vm870, %v1367, -inf
        %1373 = vmax.xlane.f32.xlu0 %v1372
        %v1374 = vpop.xlane.xlu0 %1373
        %v1375 = vsub.f32 %v1367, %v1374
        %v1376 = vmul.f32 %v1375, 1.442695
        %v1377 = vpow.pop %v1376
        %v1378 = vsel %vm870, %v1377, 0.0
        %1379 = vadd.xlane.f32.xlu0 %v1378
        %v1380 = vpop.xlane.xlu0 %1379
        %v1381 = vrcp.pop %v1380
        %v1382 = vpack.c.bf16 %v1377, %v1377
        %1383 = vrot.lane.b32.xlu0 %v806, 32
        %v1384 = vpop.permute.xlu0 %1383
        %v1386 = vsel %vm870, %v1382, 0
        %v1389 = vsel %vm885, %v1384, 0
        %1391 = vmatprep.subr.bf16.mxu0 0
        %1392 = vmatpush1.bf16.msra.mxu0 0
        %1393 = vmatprep.subr.bf16.mxu0 0
        %1394 = vmatpush1.bf16.msra.mxu0 0
        %1395 = vmatprep.subr.bf16.mxu0 0
        %1396 = vmatpush1.bf16.msra.mxu0 0
        %1397 = vmatprep.subr.bf16.mxu0 0
        %1398 = vmatpush1.bf16.msra.mxu0 0
        %1399 = vmatprep.subr.bf16.mxu0 0
        %1400 = vmatpush1.bf16.msra.mxu0 0
        %1401 = vmatprep.subr.bf16.mxu0 0
        %1402 = vmatpush1.bf16.msra.mxu0 0
        %1403 = vmatprep.subr.bf16.mxu0 0
        %1404 = vmatpush1.bf16.msra.mxu0 0
        %1405 = vmatprep.subr.bf16.mxu0 0
        %1406 = vmatpush1.bf16.msra.mxu0 %v1389
        %1407 = vmatprep.subr.bf16.mxu0 0
        %1408 = vmatpush2.bf16.msra.mxu0 0
        %1409 = vmatprep.subr.bf16.mxu0 0
        %1410 = vmatpush2.bf16.msra.mxu0 0
        %1411 = vmatprep.subr.bf16.mxu0 0
        %1412 = vmatpush2.bf16.msra.mxu0 0
        %1413 = vmatprep.subr.bf16.mxu0 0
        %1414 = vmatpush2.bf16.msra.mxu0 0
        %1415 = vmatprep.subr.bf16.mxu0 0
        %1416 = vmatpush2.bf16.msra.mxu0 0
        %1417 = vmatprep.subr.bf16.mxu0 0
        %1418 = vmatpush2.bf16.msra.mxu0 0
        %1419 = vmatprep.subr.bf16.mxu0 0
        %1420 = vmatpush2.bf16.msra.mxu0 0
        %1421 = vmatprep.subr.bf16.mxu0 0
        %1422 = vmatpush2.bf16.msra.mxu0 0
        %1423 = vmatprep.mubr.bf16.mxu0 0
        %1424 = vmatmul.mubr.bf16.gmra.mxu0 %v1386
        %v1425 = vpop.f32.mrf.mxu0
        %v1426 = vadd.f32 0.0, %v1425
        %v1427 = vpop.f32.mrf.mxu0
        %v1428 = vpop.f32.mrf.mxu0
        %v1429 = vpop.f32.mrf.mxu0
        %1430 = vdwg.mxu0
        %v1431 = vmul.f32 %v1426, %v1381
        %v1432 = vpack.c.bf16 %v1431, %v1431
        %v1437 = vunpack.c.l.b16 %v819
        %v1438 = vunpack.c.l.b16 %v820
        %v1439 = vunpack.c.l.b16 %v821
        %v1440 = vunpack.c.l.b16 %v822
        %v1441 = vpack.c.b16 %v1438, %v1437
        %v1442 = vpack.c.b16 %v1440, %v1439
        %v1446 = vsel %vm823, %v1432, 0
        %1448 = vmatprep.subr.bf16.mxu0 0
        %1449 = vmatpush1.bf16.msra.mxu0 0
        %1450 = vmatprep.subr.bf16.mxu0 0
        %1451 = vmatpush1.bf16.msra.mxu0 0
        %1452 = vmatprep.subr.bf16.mxu0 0
        %1453 = vmatpush1.bf16.msra.mxu0 0
        %1454 = vmatprep.subr.bf16.mxu0 0
        %1455 = vmatpush1.bf16.msra.mxu0 0
        %1456 = vmatprep.subr.bf16.mxu0 0
        %1457 = vmatpush1.bf16.msra.mxu0 0
        %1458 = vmatprep.subr.bf16.mxu0 0
        %1459 = vmatpush1.bf16.msra.mxu0 0
        %1460 = vmatprep.subr.bf16.mxu0 0
        %1461 = vmatpush1.bf16.msra.mxu0 %v1442
        %1462 = vmatprep.subr.bf16.mxu0 0
        %1463 = vmatpush1.bf16.msra.mxu0 %v1441
        %1464 = vmatprep.subr.bf16.mxu0 0
        %1465 = vmatpush2.bf16.msra.mxu0 0
        %1466 = vmatprep.subr.bf16.mxu0 0
        %1467 = vmatpush2.bf16.msra.mxu0 0
        %1468 = vmatprep.subr.bf16.mxu0 0
        %1469 = vmatpush2.bf16.msra.mxu0 0
        %1470 = vmatprep.subr.bf16.mxu0 0
        %1471 = vmatpush2.bf16.msra.mxu0 0
        %1472 = vmatprep.subr.bf16.mxu0 0
        %1473 = vmatpush2.bf16.msra.mxu0 0
        %1474 = vmatprep.subr.bf16.mxu0 0
        %1475 = vmatpush2.bf16.msra.mxu0 0
        %1476 = vmatprep.subr.bf16.mxu0 0
        %1477 = vmatpush2.bf16.msra.mxu0 0
        %1478 = vmatprep.subr.bf16.mxu0 0
        %1479 = vmatpush2.bf16.msra.mxu0 0
        %1480 = vmatprep.mubr.bf16.mxu0 0
        %1481 = vmatmul.mubr.bf16.gmra.mxu0 %v1446
        %v1482 = vpop.f32.mrf.mxu0
        %v1483 = vadd.f32 0.0, %v1482
        %v1484 = vpop.f32.mrf.mxu0
        %v1485 = vpop.f32.mrf.mxu0
        %v1486 = vpop.f32.mrf.mxu0
        %1487 = vdwg.mxu0
        %v1488 = vadd.f32 %v1321, %v1483
        %v1489 = vadd.f32 %v516, %v1488
        %v1490 = vld [vmem:[%s6] sm:$0x1]
        %v1492 = vlaneseq
        %v1493 = vshrl.u32 %v1492, 7
        %v1494 = vsub.s32 0, %v1493
        %v1495 = vrot.slane %v1490, %v1494
        %v1497 = vadd.f32 %v1489, %v1495
        %1498 = vadd.xlane.f32.xlu0 %v1497
        %v1499 = vpop.xlane.xlu0 %1498
        %v1500 = vmul.f32 %v1499, %v519
        %v1501 = vsub.f32 %v1497, %v1500
        %v1502 = vmul.f32 %v1501, %v1501
        %1503 = vadd.xlane.f32.xlu0 %v1502
        %v1504 = vpop.xlane.xlu0 %1503
        %v1505 = vmul.f32 %v1504, %v519
        %v1506 = vadd.f32 %v1505, 1e-05
        %v1507 = vrsqrt.pop %v1506
        %v1508 = vmul.f32 %v1501, %v1507
        %v1509 = vld [vmem:[%s7] sm:$0x1]
        %v1511 = vlaneseq
        %v1512 = vshrl.u32 %v1511, 7
        %v1513 = vsub.s32 0, %v1512
        %v1514 = vrot.slane %v1509, %v1513
        %v1516 = vmul.f32 %v1508, %v1514
        %v1517 = vld [vmem:[%s8] sm:$0x1]
        %v1519 = vlaneseq
        %v1520 = vshrl.u32 %v1519, 7
        %v1521 = vsub.s32 0, %v1520
        %v1522 = vrot.slane %v1517, %v1521
        %v1524 = vadd.f32 %v1516, %v1522
        %v1525 = vpack.c.bf16 %v1524, %v1524
        %v1526 = vld [vmem:[#allocation8] sm:$0xff]
        %v1527 = vld [vmem:[#allocation8 + $0x8] sm:$0xff]
        %v1528 = vld [vmem:[#allocation8 + $0x10] sm:$0xff]
        %v1529 = vld [vmem:[#allocation8 + $0x18] sm:$0xff]
        %v1530 = vld [vmem:[#allocation8 + $0x20] sm:$0xff]
        %v1531 = vld [vmem:[#allocation8 + $0x28] sm:$0xff]
        %v1532 = vld [vmem:[#allocation8 + $0x30] sm:$0xff]
        %v1533 = vld [vmem:[#allocation8 + $0x38] sm:$0xff]
        %v1534 = vld [vmem:[#allocation8 + $0x40] sm:$0xff]
        %v1535 = vld [vmem:[#allocation8 + $0x48] sm:$0xff]
        %v1536 = vld [vmem:[#allocation8 + $0x50] sm:$0xff]
        %v1537 = vld [vmem:[#allocation8 + $0x58] sm:$0xff]
        %v1538 = vld [vmem:[#allocation8 + $0x60] sm:$0xff]
        %v1539 = vld [vmem:[#allocation8 + $0x68] sm:$0xff]
        %v1540 = vld [vmem:[#allocation8 + $0x70] sm:$0xff]
        %v1541 = vld [vmem:[#allocation8 + $0x78] sm:$0xff]
        %v1542 = vld [vmem:[%s10] sm:$0x3]
        %v1544 = vlaneseq
        %v1545 = vshrl.u32 %v1544, 7
        %v1546 = vsub.s32 0, %v1545
        %v1547 = vrot.slane %v1542, %v1546
        %v1548 = vlaneseq
        %v1549 = vshrl.u32 %v1548, 7
        %v1550 = vsub.s32 1, %v1549
        %v1551 = vrot.slane %v1542, %v1550
        %v1570 = vunpack.c.l.b16 %v1526
        %v1571 = vunpack.c.h.b16 %v1526
        %v1572 = vunpack.c.l.b16 %v1527
        %v1573 = vunpack.c.h.b16 %v1527
        %v1574 = vunpack.c.l.b16 %v1528
        %v1575 = vunpack.c.h.b16 %v1528
        %v1576 = vunpack.c.l.b16 %v1529
        %v1577 = vunpack.c.h.b16 %v1529
        %v1578 = vunpack.c.l.b16 %v1530
        %v1579 = vunpack.c.h.b16 %v1530
        %v1580 = vunpack.c.l.b16 %v1531
        %v1581 = vunpack.c.h.b16 %v1531
        %v1582 = vunpack.c.l.b16 %v1532
        %v1583 = vunpack.c.h.b16 %v1532
        %v1584 = vunpack.c.l.b16 %v1533
        %v1585 = vunpack.c.h.b16 %v1533
        %v1586 = vunpack.c.l.b16 %v1534
        %v1587 = vunpack.c.h.b16 %v1534
        %v1588 = vunpack.c.l.b16 %v1535
        %v1589 = vunpack.c.h.b16 %v1535
        %v1590 = vunpack.c.l.b16 %v1536
        %v1591 = vunpack.c.h.b16 %v1536
        %v1592 = vunpack.c.l.b16 %v1537
        %v1593 = vunpack.c.h.b16 %v1537
        %v1594 = vunpack.c.l.b16 %v1538
        %v1595 = vunpack.c.h.b16 %v1538
        %v1596 = vunpack.c.l.b16 %v1539
        %v1597 = vunpack.c.h.b16 %v1539
        %v1598 = vunpack.c.l.b16 %v1540
        %v1599 = vunpack.c.h.b16 %v1540
        %v1600 = vunpack.c.l.b16 %v1541
        %v1601 = vunpack.c.h.b16 %v1541
        %v1602 = vpack.c.b16 %v1572, %v1570
        %v1603 = vpack.c.b16 %v1573, %v1571
        %v1604 = vpack.c.b16 %v1576, %v1574
        %v1605 = vpack.c.b16 %v1577, %v1575
        %v1606 = vpack.c.b16 %v1580, %v1578
        %v1607 = vpack.c.b16 %v1581, %v1579
        %v1608 = vpack.c.b16 %v1584, %v1582
        %v1609 = vpack.c.b16 %v1585, %v1583
        %v1610 = vpack.c.b16 %v1588, %v1586
        %v1611 = vpack.c.b16 %v1589, %v1587
        %v1612 = vpack.c.b16 %v1592, %v1590
        %v1613 = vpack.c.b16 %v1593, %v1591
        %v1614 = vpack.c.b16 %v1596, %v1594
        %v1615 = vpack.c.b16 %v1597, %v1595
        %v1616 = vpack.c.b16 %v1600, %v1598
        %v1617 = vpack.c.b16 %v1601, %v1599
        %1634 = vmatprep.subr.bf16.mxu0 %v1617
        %1635 = vmatpush1.bf16.msra.mxu0 %v1616
        %1636 = vmatprep.subr.bf16.mxu0 %v1615
        %1637 = vmatpush1.bf16.msra.mxu0 %v1614
        %1638 = vmatprep.subr.bf16.mxu0 %v1613
        %1639 = vmatpush1.bf16.msra.mxu0 %v1612
        %1640 = vmatprep.subr.bf16.mxu0 %v1611
        %1641 = vmatpush1.bf16.msra.mxu0 %v1610
        %1642 = vmatprep.subr.bf16.mxu0 %v1609
        %1643 = vmatpush1.bf16.msra.mxu0 %v1608
        %1644 = vmatprep.subr.bf16.mxu0 %v1607
        %1645 = vmatpush1.bf16.msra.mxu0 %v1606
        %1646 = vmatprep.subr.bf16.mxu0 %v1605
        %1647 = vmatpush1.bf16.msra.mxu0 %v1604
        %1648 = vmatprep.subr.bf16.mxu0 %v1603
        %1649 = vmatpush1.bf16.msra.mxu0 %v1602
        %1650 = vmatprep.subr.bf16.mxu0 0
        %1651 = vmatpush2.bf16.msra.mxu0 0
        %1652 = vmatprep.subr.bf16.mxu0 0
        %1653 = vmatpush2.bf16.msra.mxu0 0
        %1654 = vmatprep.subr.bf16.mxu0 0
        %1655 = vmatpush2.bf16.msra.mxu0 0
        %1656 = vmatprep.subr.bf16.mxu0 0
        %1657 = vmatpush2.bf16.msra.mxu0 0
        %1658 = vmatprep.subr.bf16.mxu0 0
        %1659 = vmatpush2.bf16.msra.mxu0 0
        %1660 = vmatprep.subr.bf16.mxu0 0
        %1661 = vmatpush2.bf16.msra.mxu0 0
        %1662 = vmatprep.subr.bf16.mxu0 0
        %1663 = vmatpush2.bf16.msra.mxu0 0
        %1664 = vmatprep.subr.bf16.mxu0 0
        %1665 = vmatpush2.bf16.msra.mxu0 0
        %1666 = vmatprep.mubr.bf16.mxu0 0
        %1667 = vmatmul.mubr.bf16.gmra.mxu0 %v1525
        %v1668 = vpop.f32.mrf.mxu0
        %v1669 = vadd.f32 %v1547, %v1668
        %v1670 = vpop.f32.mrf.mxu0
        %v1671 = vadd.f32 %v1551, %v1670
        %v1672 = vpop.f32.mrf.mxu0
        %v1673 = vpop.f32.mrf.mxu0
        %1674 = vdwg.mxu0
        %v1675 = vmax.f32 %v1669, 0.0
        %v1676 = vmax.f32 %v1671, 0.0
        %v1677 = vpack.c.bf16 %v1675, %v1675
        %v1678 = vpack.c.bf16 %v1676, %v1676
        %v1679 = vld [vmem:[#allocation10] sm:$0xf]
        %v1680 = vld [vmem:[#allocation10 + $0x4] sm:$0xf]
        %v1681 = vld [vmem:[#allocation10 + $0x8] sm:$0xf]
        %v1682 = vld [vmem:[#allocation10 + $0xc] sm:$0xf]
        %v1683 = vld [vmem:[#allocation10 + $0x10] sm:$0xf]
        %v1684 = vld [vmem:[#allocation10 + $0x14] sm:$0xf]
        %v1685 = vld [vmem:[#allocation10 + $0x18] sm:$0xf]
        %v1686 = vld [vmem:[#allocation10 + $0x1c] sm:$0xf]
        %v1687 = vld [vmem:[#allocation10 + $0x20] sm:$0xf]
        %v1688 = vld [vmem:[#allocation10 + $0x24] sm:$0xf]
        %v1689 = vld [vmem:[#allocation10 + $0x28] sm:$0xf]
        %v1690 = vld [vmem:[#allocation10 + $0x2c] sm:$0xf]
        %v1691 = vld [vmem:[#allocation10 + $0x30] sm:$0xf]
        %v1692 = vld [vmem:[#allocation10 + $0x34] sm:$0xf]
        %v1693 = vld [vmem:[#allocation10 + $0x38] sm:$0xf]
        %v1694 = vld [vmem:[#allocation10 + $0x3c] sm:$0xf]
        %v1695 = vld [vmem:[#allocation10 + $0x40] sm:$0xf]
        %v1696 = vld [vmem:[#allocation10 + $0x44] sm:$0xf]
        %v1697 = vld [vmem:[#allocation10 + $0x48] sm:$0xf]
        %v1698 = vld [vmem:[#allocation10 + $0x4c] sm:$0xf]
        %v1699 = vld [vmem:[#allocation10 + $0x50] sm:$0xf]
        %v1700 = vld [vmem:[#allocation10 + $0x54] sm:$0xf]
        %v1701 = vld [vmem:[#allocation10 + $0x58] sm:$0xf]
        %v1702 = vld [vmem:[#allocation10 + $0x5c] sm:$0xf]
        %v1703 = vld [vmem:[#allocation10 + $0x60] sm:$0xf]
        %v1704 = vld [vmem:[#allocation10 + $0x64] sm:$0xf]
        %v1705 = vld [vmem:[#allocation10 + $0x68] sm:$0xf]
        %v1706 = vld [vmem:[#allocation10 + $0x6c] sm:$0xf]
        %v1707 = vld [vmem:[#allocation10 + $0x70] sm:$0xf]
        %v1708 = vld [vmem:[#allocation10 + $0x74] sm:$0xf]
        %v1709 = vld [vmem:[#allocation10 + $0x78] sm:$0xf]
        %v1710 = vld [vmem:[#allocation10 + $0x7c] sm:$0xf]
        %v1711 = vld [vmem:[%s12] sm:$0x1]
        %v1713 = vlaneseq
        %v1714 = vshrl.u32 %v1713, 7
        %v1715 = vsub.s32 0, %v1714
        %v1716 = vrot.slane %v1711, %v1715
        %v1750 = vunpack.c.l.b16 %v1679
        %v1751 = vunpack.c.l.b16 %v1680
        %v1752 = vunpack.c.l.b16 %v1681
        %v1753 = vunpack.c.l.b16 %v1682
        %v1754 = vunpack.c.l.b16 %v1683
        %v1755 = vunpack.c.l.b16 %v1684
        %v1756 = vunpack.c.l.b16 %v1685
        %v1757 = vunpack.c.l.b16 %v1686
        %v1758 = vunpack.c.l.b16 %v1687
        %v1759 = vunpack.c.l.b16 %v1688
        %v1760 = vunpack.c.l.b16 %v1689
        %v1761 = vunpack.c.l.b16 %v1690
        %v1762 = vunpack.c.l.b16 %v1691
        %v1763 = vunpack.c.l.b16 %v1692
        %v1764 = vunpack.c.l.b16 %v1693
        %v1765 = vunpack.c.l.b16 %v1694
        %v1766 = vunpack.c.l.b16 %v1695
        %v1767 = vunpack.c.l.b16 %v1696
        %v1768 = vunpack.c.l.b16 %v1697
        %v1769 = vunpack.c.l.b16 %v1698
        %v1770 = vunpack.c.l.b16 %v1699
        %v1771 = vunpack.c.l.b16 %v1700
        %v1772 = vunpack.c.l.b16 %v1701
        %v1773 = vunpack.c.l.b16 %v1702
        %v1774 = vunpack.c.l.b16 %v1703
        %v1775 = vunpack.c.l.b16 %v1704
        %v1776 = vunpack.c.l.b16 %v1705
        %v1777 = vunpack.c.l.b16 %v1706
        %v1778 = vunpack.c.l.b16 %v1707
        %v1779 = vunpack.c.l.b16 %v1708
        %v1780 = vunpack.c.l.b16 %v1709
        %v1781 = vunpack.c.l.b16 %v1710
        %v1782 = vpack.c.b16 %v1751, %v1750
        %v1783 = vpack.c.b16 %v1753, %v1752
        %v1784 = vpack.c.b16 %v1755, %v1754
        %v1785 = vpack.c.b16 %v1757, %v1756
        %v1786 = vpack.c.b16 %v1759, %v1758
        %v1787 = vpack.c.b16 %v1761, %v1760
        %v1788 = vpack.c.b16 %v1763, %v1762
        %v1789 = vpack.c.b16 %v1765, %v1764
        %v1790 = vpack.c.b16 %v1767, %v1766
        %v1791 = vpack.c.b16 %v1769, %v1768
        %v1792 = vpack.c.b16 %v1771, %v1770
        %v1793 = vpack.c.b16 %v1773, %v1772
        %v1794 = vpack.c.b16 %v1775, %v1774
        %v1795 = vpack.c.b16 %v1777, %v1776
        %v1796 = vpack.c.b16 %v1779, %v1778
        %v1797 = vpack.c.b16 %v1781, %v1780
        %1814 = vmatprep.subr.bf16.mxu0 0
        %1815 = vmatpush1.bf16.msra.mxu0 %v1789
        %1816 = vmatprep.subr.bf16.mxu0 0
        %1817 = vmatpush1.bf16.msra.mxu0 %v1788
        %1818 = vmatprep.subr.bf16.mxu0 0
        %1819 = vmatpush1.bf16.msra.mxu0 %v1787
        %1820 = vmatprep.subr.bf16.mxu0 0
        %1821 = vmatpush1.bf16.msra.mxu0 %v1786
        %1822 = vmatprep.subr.bf16.mxu0 0
        %1823 = vmatpush1.bf16.msra.mxu0 %v1785
        %1824 = vmatprep.subr.bf16.mxu0 0
        %1825 = vmatpush1.bf16.msra.mxu0 %v1784
        %1826 = vmatprep.subr.bf16.mxu0 0
        %1827 = vmatpush1.bf16.msra.mxu0 %v1783
        %1828 = vmatprep.subr.bf16.mxu0 0
        %1829 = vmatpush1.bf16.msra.mxu0 %v1782
        %1830 = vmatprep.subr.bf16.mxu0 0
        %1831 = vmatpush2.bf16.msra.mxu0 %v1797
        %1832 = vmatprep.subr.bf16.mxu0 0
        %1833 = vmatpush2.bf16.msra.mxu0 %v1796
        %1834 = vmatprep.subr.bf16.mxu0 0
        %1835 = vmatpush2.bf16.msra.mxu0 %v1795
        %1836 = vmatprep.subr.bf16.mxu0 0
        %1837 = vmatpush2.bf16.msra.mxu0 %v1794
        %1838 = vmatprep.subr.bf16.mxu0 0
        %1839 = vmatpush2.bf16.msra.mxu0 %v1793
        %1840 = vmatprep.subr.bf16.mxu0 0
        %1841 = vmatpush2.bf16.msra.mxu0 %v1792
        %1842 = vmatprep.subr.bf16.mxu0 0
        %1843 = vmatpush2.bf16.msra.mxu0 %v1791
        %1844 = vmatprep.subr.bf16.mxu0 0
        %1845 = vmatpush2.bf16.msra.mxu0 %v1790
        %1846 = vmatprep.mubr.bf16.mxu0 %v1678
        %1847 = vmatmul.mubr.bf16.gmra.mxu0 %v1677
        %v1848 = vpop.f32.mrf.mxu0
        %v1849 = vadd.f32 %v1716, %v1848
        %v1850 = vpop.f32.mrf.mxu0
        %v1851 = vpop.f32.mrf.mxu0
        %v1852 = vpop.f32.mrf.mxu0
        %1853 = vdwg.mxu0
        %v1854 = vadd.f32 %v1497, %v1849
        %v1855 = vpack.c.bf16 %v1854, %v1854
        %1856 = vst [vmem:[%s513] sm:$0xf] %v1855
        %s1857 = sand.u32 %s318, 1
        %s1858 = scalar_lea.sflag [#allocation4], %s1857
        %s1859 = sand.u32 %s318, 1
        %s1860 = smul.addr %s1859, 4
        %s1861 = scalar_lea.vmem [#allocation11], %s1860
        // Predicated region
        $region93: #{transformer_encoder_layer.1} parent=71 // pred_check
          %p1862 = pneg %p328
        $region94: #{transformer_encoder_layer.1} parent=71 // pred_check_branch
          %1864 = sbr.rel (%p1862) target = $region96
        $region95: #{transformer_encoder_layer.1} parent=71 // pred_region
          %s1866 = ssub.s32 64, 64
          %1867 = vsyncadd %s1858, %s1866
          %s1868 = smul.addr %s32, 64
          %s1869 = scalar_lea.hbm %s13, %s1868
          %s1871 = sshll.u32 %s1861, 4
          %s1872 = int_to_ptr.vmem [resolvable:$true] %s1871
          %1874 = dma.vmem_to_hbm [thread:$0]  %s1872, 64, %s1869, %s1858
        $region96: #{transformer_encoder_layer.1} parent=71 // pred_fallthru
          _
      $region72: #{transformer_encoder_layer.1} parent=5 // pred_fallthru
        _
      %p1875 = scmp.le.s32.totalorder 2, %s27
      // Predicated region
      $region97: #{transformer_encoder_layer.1} parent=5 // pred_check
        %p1876 = pneg %p1875
      $region98: #{transformer_encoder_layer.1} parent=5 // pred_check_branch
        %1878 = sbr.rel (%p1876) target = $region100
      $region99: #{transformer_encoder_layer.1} parent=5 // pred_region
        %s1879 = ssub.s32 %s27, 2
        // Predicated region
        $region101: #{transformer_encoder_layer.1} parent=99 // pred_check
          %p1880 = pneg %p334
        $region102: #{transformer_encoder_layer.1} parent=99 // pred_check_branch
          %1882 = sbr.rel (%p1880) target = $region104
        $region103: #{transformer_encoder_layer.1} parent=99 // pred_region
          %s1883 = sand.u32 %s319, 1
          %s1884 = scalar_lea.sflag [#allocation4], %s1883
          %s1885 = sand.u32 %s319, 1
          %s1886 = smul.addr %s1885, 4
          %s1887 = scalar_lea.vmem [#allocation11], %s1886
          %1888 = dma.done %s1884, 64
        $region104: #{transformer_encoder_layer.1} parent=99 // pred_fallthru
          _
      $region100: #{transformer_encoder_layer.1} parent=5 // pred_fallthru
        _
    $region6: #{transformer_encoder_layer.1} parent=1 // loop_footer
      %s31 = sadd.s32 1, %s27
    $region7: #{transformer_encoder_layer.1} parent=1 // loop_footer_branch
      %26 = sbr.rel target = $region3
    $region8: #{transformer_encoder_layer.1} parent=1 // loop_exit
      _
    %1889 = vsyncpa [#allocation3], 1
    %s1890 = scalar_lea.sflag [#allocation3], 1
    %1891 = vsyncpa %s1890, 1
    %1892 = vsyncpa [#allocation6], 1
    %1893 = vsyncpa [#allocation9], 1
    %1894 = vsyncpa [#allocation4], 1
    %s1895 = scalar_lea.sflag [#allocation4], 1
    %1896 = vsyncpa %s1895, 1

</llo_original>
